<compile_context>
chip_gen: v6e
topology: v6e:2x2x1
jax: 0.10.0
libtpu: 0.0.40
codegen_flags: <defaults>
</compile_context>

<pallas_src>
import jax
import jax.numpy as jnp
from jax.experimental import pallas as pl
from jax.experimental.pallas import tpu as pltpu

NEG_SLOPE = 0.1                      # LeakyReLU(0.1)
HIGH = jax.lax.Precision.HIGHEST     # only used by the pure-JAX reference


def _round_up(v, m):
    return (v + m - 1) // m * m


# ------------------------------ fused Pallas kernel ------------------------- #

def _unet_branch_kernel(pb_ref, ph0_ref, ph1_ref, ph2_ref,
                        w0_ref, b0_ref, wm_ref, bm_ref, w1_ref, b1_ref,
                        o_ref, y0_sc, col_sc):
    """One (batch image, row-tile) step of the fused UnetBranch forward.

    pb_ref : (1, TR*Whp, 4C) bf16  body tile of space-to-depth'ed input patches
    ph*_ref: (1, Whp,   4C) bf16  three halo spatial rows below the tile
    w*/b*  : GEMM-layout weights (bf16) / biases (f32), VMEM-resident
    o_ref  : (1, TR*Whp, 4C) bf16 output 2x2 patches (+ residual already added)
    y0_sc  : VMEM (TR*Whp + 3*Whp, C)  bf16  conv0 output (body + halo rows)
    col_sc : VMEM (TR*Whp, 9C)         bf16  im2col slab for the 3x3 conv
    """
    m_out = o_ref.shape[1]           # TR * Whp   (flat spatial rows in tile)
    c4 = o_ref.shape[2]              # 4 * C
    whp = ph0_ref.shape[1]           # padded half-width (multiple of 8)
    c = c4 // 4

    def lrelu(v):
        return jnp.maximum(v, NEG_SLOPE * v)

    # ---- conv0: Conv2d(C,C,2,stride=2) == GEMM over 4C patch features --------
    # Body tile straight from the pipelined input block (no VMEM->VMEM copy).
    y0b = jnp.dot(pb_ref[0], w0_ref[...], preferred_element_type=jnp.float32)
    y0_sc[0:m_out, :] = lrelu(y0b + b0_ref[...]).astype(y0_sc.dtype)
    # Three tiny GEMMs for the halo spatial rows below the tile.
    for k, href in enumerate((ph0_ref, ph1_ref, ph2_ref)):
        yh = jnp.dot(href[0], w0_ref[...], preferred_element_type=jnp.float32)
        y0_sc[m_out + k * whp:m_out + (k + 1) * whp, :] = (
            lrelu(yh + b0_ref[...]).astype(y0_sc.dtype))

    # ---- insert: Conv2d(C,C,3,valid) == ONE (m, 9C) x (9C, C) GEMM -----------
    # Build the im2col slab once (each shifted copy happens exactly once).
    for a in range(3):
        for b in range(3):
            tap = 3 * a + b
            off = a * whp + b
            col_sc[:, tap * c:(tap + 1) * c] = y0_sc[off:off + m_out, :]
    z = jnp.dot(col_sc[...], wm_ref[...], preferred_element_type=jnp.float32)
    z = lrelu(z + bm_ref[...]).astype(jnp.bfloat16)

    # ---- conv1: ConvTranspose2d(C,C,2,stride=2) == GEMM into 2x2 patches -----
    y1 = jnp.dot(z, w1_ref[...], preferred_element_type=jnp.float32)
    y1 = lrelu(y1 + b1_ref[...])

    # ---- residual (SpatialZeroPadding(-2) crop) -------------------------------
    # Residual for output flat row m is input patch row m + whp + 1.  Source it
    # from the already-resident input/halo blocks (f32 add, bf16 store).
    nb = m_out - whp - 1                       # rows whose residual lies in pb
    o_ref[0, 0:nb, :] = (
        y1[0:nb] + pb_ref[0, whp + 1:m_out, :].astype(jnp.float32)
    ).astype(o_ref.dtype)
    o_ref[0, nb:nb + whp, :] = (
        y1[nb:nb + whp] + ph0_ref[0].astype(jnp.float32)
    ).astype(o_ref.dtype)
    o_ref[0, nb + whp:m_out, :] = (
        y1[nb + whp:m_out] + ph1_ref[0, 0:1, :].astype(jnp.float32)
    ).astype(o_ref.dtype)


# ---------------------------------- wrapper --------------------------------- #

def _space_to_depth(x_nhwc):
    """(N,H,W,C) -> (N,H/2,W/2,4C); feature order within 4C is (dy, dx, c)."""
    n, h, w, c = x_nhwc.shape
    x = x_nhwc.reshape(n, h // 2, 2, w // 2, 2, c).transpose(0, 1, 3, 2, 4, 5)
    return x.reshape(n, h // 2, w // 2, 4 * c)


def _depth_to_space(p):
    """(N,Hh,Wh,4C) patches -> (N,2Hh,2Wh,C)."""
    n, hh, ww, c4 = p.shape
    c = c4 // 4
    x = p.reshape(n, hh, ww, 2, 2, c).transpose(0, 1, 3, 2, 4, 5)
    return x.reshape(n, 2 * hh, 2 * ww, c)


def _vmem_plan():
    """(per-step tile budget, vmem_limit_bytes) sized per TPU generation."""
    cap = 64 * 1024 * 1024                    # conservative default (v7x-like)
    try:
        info = pltpu.get_tpu_info()
        cap = int(getattr(info, "vmem_capacity_bytes", cap)) or cap
    except Exception:
        pass
    if cap >= 100 * 1024 * 1024:              # v5e / v6e: 128 MiB physical VMEM
        return 32 * 1024 * 1024, 96 * 1024 * 1024
    return 10 * 1024 * 1024, 32 * 1024 * 1024  # v7x: 64 MiB per TensorCore


def _pick_tile_rows(hm, whp, c, budget_bytes):
    """Rows of half-res output per tile; hm is padded up to a multiple of it."""
    per_row = whp * c * (
        2 * 4 * 2       # body input tile: 4C bf16, double-buffered
        + 2 * 4 * 2     # output tile:     4C bf16, double-buffered
        + 2             # conv0 scratch:    C bf16
        + 2 * 9         # im2col scratch: 9C bf16
    )
    max_rows = max(2, budget_bytes // per_row)   # >=2 so the residual split works
    return int(min(hm, max_rows))


def prepare_params(params):
    """One-time (hoisted out of forward) conversion of PyTorch-layout weights
    into bf16 GEMM layout + f32 biases."""
    w0, b0 = params["w0"], params["b0"]
    wm, bm = params["wm"], params["bm"]
    w1, b1 = params["w1"], params["b1"]
    c = w0.shape[0]
    return {
        # Conv2d(C,C,2,2):  [(dy,dx,ci) -> co]
        "w0m": jnp.transpose(w0, (2, 3, 1, 0)).reshape(4 * c, c).astype(jnp.bfloat16),
        "b0m": b0.reshape(1, c).astype(jnp.float32),
        # insert Conv2d(C,C,3,3): single (9C, C) GEMM weight, rows = (a, b, ci)
        "wmm": jnp.transpose(wm, (2, 3, 1, 0)).reshape(9 * c, c).astype(jnp.bfloat16),
        "bmm": bm.reshape(1, c).astype(jnp.float32),
        # ConvTranspose2d(C,C,2,2): [ci -> (dy,dx,co)]
        "w1m": jnp.transpose(w1, (0, 2, 3, 1)).reshape(c, 4 * c).astype(jnp.bfloat16),
        "b1m": jnp.broadcast_to(b1[None, :], (4, c)).reshape(1, 4 * c).astype(jnp.float32),
    }


def unet_branch_forward(x_nchw, prep):
    """UnetBranch.forward with insert = Conv2d(C,C,3,valid)+LeakyReLU, depad=-2."""
    n, c, h, w = x_nchw.shape
    assert h % 2 == 0 and w % 2 == 0 and h >= 8 and w >= 8
    hh, wh = h // 2, w // 2
    hm, wmo = hh - 2, wh - 2          # spatial size after the 3x3 valid conv
    whp = _round_up(wh, 8)            # pad half-width so row tiles are 8-aligned
    c4 = 4 * c

    budget, vmem_limit = _vmem_plan()
    tr = _pick_tile_rows(hm, whp, c, budget)
    t = -(-hm // tr)                  # ceil-div: no tr | hm requirement
    hm_pad = t * tr
    m_tile = tr * whp

    # ---- layout glue: one pass over the input (bf16 halves HBM traffic) ----
    # TODO(synk): if the surrounding network consumes NHWC / patch layout, the
    #             NCHW transposes + (un)patching round trips can be dropped.
    x_nhwc = jnp.transpose(x_nchw, (0, 2, 3, 1)).astype(jnp.bfloat16)
    p0 = _space_to_depth(x_nhwc)                                # (n, hh, wh, 4c)
    extra_rows = hm_pad + 3 - hh      # zero rows so every tile's halo is in range
    p0 = jnp.pad(p0, ((0, 0), (0, extra_rows), (0, whp - wh), (0, 0)))
    p0f = p0.reshape(n, (hm_pad + 3) * whp, c4)                 # flat (rows, 4c)

    out_wide = pl.pallas_call(
        _unet_branch_kernel,
        out_shape=jax.ShapeDtypeStruct((n, hm_pad * whp, c4), jnp.bfloat16),
        grid_spec=pltpu.PrefetchScalarGridSpec(
            num_scalar_prefetch=0,
            grid=(n, t),
            in_specs=[
                # activation body tile (auto double-buffered across grid steps)
                pl.BlockSpec((1, m_tile, c4), lambda bi, ti: (bi, ti, 0)),
                # three single-spatial-row halo blocks just below the tile
                pl.BlockSpec((1, whp, c4), lambda bi, ti: (bi, (ti + 1) * tr, 0)),
                pl.BlockSpec((1, whp, c4), lambda bi, ti: (bi, (ti + 1) * tr + 1, 0)),
                pl.BlockSpec((1, whp, c4), lambda bi, ti: (bi, (ti + 1) * tr + 2, 0)),
                # weights / biases: constant index maps -> VMEM-resident
                pl.BlockSpec((c4, c), lambda bi, ti: (0, 0)),
                pl.BlockSpec((1, c), lambda bi, ti: (0, 0)),
                pl.BlockSpec((9 * c, c), lambda bi, ti: (0, 0)),
                pl.BlockSpec((1, c), lambda bi, ti: (0, 0)),
                pl.BlockSpec((c, c4), lambda bi, ti: (0, 0)),
                pl.BlockSpec((1, c4), lambda bi, ti: (0, 0)),
            ],
            out_specs=pl.BlockSpec((1, m_tile, c4), lambda bi, ti: (bi, ti, 0)),
            scratch_shapes=[
                pltpu.VMEM((m_tile + 3 * whp, c), jnp.bfloat16),   # conv0 output
                pltpu.VMEM((m_tile, 9 * c), jnp.bfloat16),         # im2col slab
            ],
        ),
        compiler_params=pltpu.CompilerParams(
            dimension_semantics=("parallel", "parallel"),   # pipelining + megacore
            vmem_limit_bytes=vmem_limit,
        ),
    )(p0f, p0f, p0f, p0f,
      prep["w0m"], prep["b0m"], prep["wmm"], prep["bmm"],
      prep["w1m"], prep["b1m"])

    # ---- layout glue (bf16): crop pads, 2x2 patches -> pixels, back to NCHW ---
    out = out_wide.reshape(n, hm_pad, whp, c4)[:, :hm, :wmo, :]
    out = _depth_to_space(out)                         # (n, 2*hm, 2*wmo, c)
    return jnp.transpose(out, (0, 3, 1, 2)).astype(jnp.float32)


# ----------------------------- pure-JAX reference ---------------------------- #

def unet_branch_reference(x, params):
    w0, b0 = params["w0"], params["b0"]
    wm, bm = params["wm"], params["bm"]
    w1, b1 = params["w1"], params["b1"]
    n, c, h, w = x.shape
    lrelu = lambda v: jnp.where(v > 0, v, NEG_SLOPE * v)

    # conv0 (2x2, stride 2)
    xr = x.reshape(n, c, h // 2, 2, w // 2, 2)
    y0 = jnp.einsum("nciajb,ocab->noij", xr, w0, precision=HIGH)
    y0 = lrelu(y0 + b0[None, :, None, None])

    # insert: 3x3 valid conv
    hh, wh = h // 2, w // 2
    hm, wmo = hh - 2, wh - 2
    ym = jnp.broadcast_to(bm[None, :, None, None], (n, c, hm, wmo))
    for a in range(3):
        for b in range(3):
            ym = ym + jnp.einsum("ncij,oc->noij",
                                 y0[:, :, a:a + hm, b:b + wmo], wm[:, :, a, b],
                                 precision=HIGH)
    ym = lrelu(ym)

    # conv1: ConvTranspose2d(2x2, stride 2)
    t = jnp.einsum("ncij,coab->noiajb", ym, w1, precision=HIGH)
    x0 = t.reshape(n, c, 2 * hm, 2 * wmo) + b1[None, :, None, None]
    x0 = lrelu(x0)

    x1 = x[:, :, 2:-2, 2:-2]
    return x0 + x1


# ----------------------------------- setup ----------------------------------- #

def init_params(key, c):
    ks = jax.random.split(key, 6)

    def uni(k, shape, fan_in):
        bound = 1.0 / (fan_in ** 0.5)
        return jax.random.uniform(k, shape, jnp.float32, -bound, bound)

    return {
        "w0": uni(ks[0], (c, c, 2, 2), c * 4),   # Conv2d weight (out, in, kh, kw)
        "b0": uni(ks[1], (c,), c * 4),
        "wm": uni(ks[2], (c, c, 3, 3), c * 9),   # insert conv weight
        "bm": uni(ks[3], (c,), c * 9),
        "w1": uni(ks[4], (c, c, 2, 2), c * 4),   # ConvTranspose2d weight (in, out, kh, kw)
        "b1": uni(ks[5], (c,), c * 4),
    }


if __name__ == "__main__":
    key = jax.random.PRNGKey(0)
    kx, kp = jax.random.split(key)

    N, C, H, W = 2, 4, 16, 16
    x = jax.random.normal(kx, (N, C, H, W), jnp.float32)
    params = init_params(kp, C)
    prep = prepare_params(params)          # hoisted weight preprocessing

    fwd = jax.jit(unet_branch_forward)
    out = jax.block_until_ready(fwd(x, prep))

    ref = unet_branch_reference(x, params)
    assert out.shape == (N, C, H - 4, W - 4), out.shape
    max_err = float(jnp.max(jnp.abs(out - ref)))
    # bf16 activations/weights/output with f32 accumulation vs f32 HIGHEST ref.
    assert jnp.allclose(out, ref, atol=5e-2, rtol=5e-2), f"max abs err {max_err}"

    print("KERNEL_OK")
</pallas_src>

<mosaic_0001>
module attributes {stable_mosaic.version = 11 : i64} {
  func.func @_unet_branch_kernel(%arg0: i32, %arg1: i32, %arg2: memref<1x48x16xbf16, #tpu.memory_space<vmem>>, %arg3: memref<1x8x16xbf16, #tpu.memory_space<vmem>>, %arg4: memref<1x8x16xbf16, #tpu.memory_space<vmem>>, %arg5: memref<1x8x16xbf16, #tpu.memory_space<vmem>>, %arg6: memref<16x4xbf16, #tpu.memory_space<vmem>>, %arg7: memref<1x4xf32, #tpu.memory_space<vmem>>, %arg8: memref<36x4xbf16, #tpu.memory_space<vmem>>, %arg9: memref<1x4xf32, #tpu.memory_space<vmem>>, %arg10: memref<4x16xbf16, #tpu.memory_space<vmem>>, %arg11: memref<1x16xf32, #tpu.memory_space<vmem>>, %arg12: memref<1x48x16xbf16, #tpu.memory_space<vmem>>, %arg13: memref<72x4xbf16, #tpu.memory_space<vmem>>, %arg14: memref<48x36xbf16, #tpu.memory_space<vmem>>) attributes {dimension_semantics = [#tpu.dimension_semantics<parallel>, #tpu.dimension_semantics<parallel>], iteration_bounds = array<i64: 2, 1>, scalar_prefetch = 0 : i64, scratch_operands = 2 : i64, tpu.core_type = #tpu.core_type<tc>, window_params = [{transform_indices = @transform_0, window_bounds = array<i64: 1, 48, 16>}, {transform_indices = @transform_1, window_bounds = array<i64: 1, 8, 16>}, {transform_indices = @transform_2, window_bounds = array<i64: 1, 8, 16>}, {transform_indices = @transform_3, window_bounds = array<i64: 1, 8, 16>}, {pipeline_mode = #tpu.pipeline_mode<synchronous>, transform_indices = @transform_4, window_bounds = array<i64: 16, 4>}, {pipeline_mode = #tpu.pipeline_mode<synchronous>, transform_indices = @transform_5, window_bounds = array<i64: 1, 4>}, {pipeline_mode = #tpu.pipeline_mode<synchronous>, transform_indices = @transform_6, window_bounds = array<i64: 36, 4>}, {pipeline_mode = #tpu.pipeline_mode<synchronous>, transform_indices = @transform_7, window_bounds = array<i64: 1, 4>}, {pipeline_mode = #tpu.pipeline_mode<synchronous>, transform_indices = @transform_8, window_bounds = array<i64: 4, 16>}, {pipeline_mode = #tpu.pipeline_mode<synchronous>, transform_indices = @transform_9, window_bounds = array<i64: 1, 16>}, {transform_indices = @transform_10, window_bounds = array<i64: 1, 48, 16>}]} {
    %c0 = arith.constant 0 : index
    %c0_0 = arith.constant 0 : index
    %c0_1 = arith.constant 0 : index
    %0 = vector.load %arg2[%c0, %c0_0, %c0_1] : memref<1x48x16xbf16, #tpu.memory_space<vmem>>, vector<1x48x16xbf16>
    %1 = vector.shape_cast %0 : vector<1x48x16xbf16> to vector<48x16xbf16>
    %c0_2 = arith.constant 0 : index
    %c0_3 = arith.constant 0 : index
    %2 = vector.load %arg6[%c0_2, %c0_3] : memref<16x4xbf16, #tpu.memory_space<vmem>>, vector<16x4xbf16>
    %cst = arith.constant dense<0.000000e+00> : vector<48x4xf32>
    %3 = tpu.matmul %1, %2, %cst {dimension_numbers = #tpu.dot_dimension_numbers<[1], [0], [0], [1], [0, 0, 1, 1], [], []>} : vector<48x16xbf16>, vector<16x4xbf16>, vector<48x4xf32> -> vector<48x4xf32>
    %c0_4 = arith.constant 0 : index
    %c0_5 = arith.constant 0 : index
    %4 = vector.load %arg7[%c0_4, %c0_5] : memref<1x4xf32, #tpu.memory_space<vmem>>, vector<1x4xf32>
    %5 = vector.broadcast %4 : vector<1x4xf32> to vector<48x4xf32>
    %6 = arith.addf %3, %5 : vector<48x4xf32>
    %cst_6 = arith.constant 1.000000e-01 : f32
    %7 = vector.broadcast %cst_6 : f32 to vector<48x4xf32>
    %8 = arith.mulf %7, %6 : vector<48x4xf32>
    %9 = arith.maximumf %6, %8 : vector<48x4xf32>
    %10 = arith.truncf %9 : vector<48x4xf32> to vector<48x4xbf16>
    %c0_7 = arith.constant 0 : index
    %c0_8 = arith.constant 0 : index
    %11 = vector.load %arg13[%c0_7, %c0_8] : memref<72x4xbf16, #tpu.memory_space<vmem>>, vector<48x4xbf16>
    tpu.vector_store %arg13[%c0_7, %c0_8], %10 {strides = array<i32>} : memref<72x4xbf16, #tpu.memory_space<vmem>>, vector<48x4xbf16>,
    %c0_9 = arith.constant 0 : index
    %c0_10 = arith.constant 0 : index
    %c0_11 = arith.constant 0 : index
    %12 = vector.load %arg3[%c0_9, %c0_10, %c0_11] : memref<1x8x16xbf16, #tpu.memory_space<vmem>>, vector<1x8x16xbf16>
    %13 = vector.shape_cast %12 : vector<1x8x16xbf16> to vector<8x16xbf16>
    %c0_12 = arith.constant 0 : index
    %c0_13 = arith.constant 0 : index
    %14 = vector.load %arg6[%c0_12, %c0_13] : memref<16x4xbf16, #tpu.memory_space<vmem>>, vector<16x4xbf16>
    %cst_14 = arith.constant dense<0.000000e+00> : vector<8x4xf32>
    %15 = tpu.matmul %13, %14, %cst_14 {dimension_numbers = #tpu.dot_dimension_numbers<[1], [0], [0], [1], [0, 0, 1, 1], [], []>} : vector<8x16xbf16>, vector<16x4xbf16>, vector<8x4xf32> -> vector<8x4xf32>
    %c0_15 = arith.constant 0 : index
    %c0_16 = arith.constant 0 : index
    %16 = vector.load %arg7[%c0_15, %c0_16] : memref<1x4xf32, #tpu.memory_space<vmem>>, vector<1x4xf32>
    %17 = vector.broadcast %16 : vector<1x4xf32> to vector<8x4xf32>
    %18 = arith.addf %15, %17 : vector<8x4xf32>
    %cst_17 = arith.constant 1.000000e-01 : f32
    %19 = vector.broadcast %cst_17 : f32 to vector<8x4xf32>
    %20 = arith.mulf %19, %18 : vector<8x4xf32>
    %21 = arith.maximumf %18, %20 : vector<8x4xf32>
    %22 = arith.truncf %21 : vector<8x4xf32> to vector<8x4xbf16>
    %c48 = arith.constant 48 : index
    %c0_18 = arith.constant 0 : index
    %23 = vector.load %arg13[%c48, %c0_18] : memref<72x4xbf16, #tpu.memory_space<vmem>>, vector<8x4xbf16>
    tpu.vector_store %arg13[%c48, %c0_18], %22 {strides = array<i32>} : memref<72x4xbf16, #tpu.memory_space<vmem>>, vector<8x4xbf16>,
    %c0_19 = arith.constant 0 : index
    %c0_20 = arith.constant 0 : index
    %c0_21 = arith.constant 0 : index
    %24 = vector.load %arg4[%c0_19, %c0_20, %c0_21] : memref<1x8x16xbf16, #tpu.memory_space<vmem>>, vector<1x8x16xbf16>
    %25 = vector.shape_cast %24 : vector<1x8x16xbf16> to vector<8x16xbf16>
    %c0_22 = arith.constant 0 : index
    %c0_23 = arith.constant 0 : index
    %26 = vector.load %arg6[%c0_22, %c0_23] : memref<16x4xbf16, #tpu.memory_space<vmem>>, vector<16x4xbf16>
    %cst_24 = arith.constant dense<0.000000e+00> : vector<8x4xf32>
    %27 = tpu.matmul %25, %26, %cst_24 {dimension_numbers = #tpu.dot_dimension_numbers<[1], [0], [0], [1], [0, 0, 1, 1], [], []>} : vector<8x16xbf16>, vector<16x4xbf16>, vector<8x4xf32> -> vector<8x4xf32>
    %c0_25 = arith.constant 0 : index
    %c0_26 = arith.constant 0 : index
    %28 = vector.load %arg7[%c0_25, %c0_26] : memref<1x4xf32, #tpu.memory_space<vmem>>, vector<1x4xf32>
    %29 = vector.broadcast %28 : vector<1x4xf32> to vector<8x4xf32>
    %30 = arith.addf %27, %29 : vector<8x4xf32>
    %cst_27 = arith.constant 1.000000e-01 : f32
    %31 = vector.broadcast %cst_27 : f32 to vector<8x4xf32>
    %32 = arith.mulf %31, %30 : vector<8x4xf32>
    %33 = arith.maximumf %30, %32 : vector<8x4xf32>
    %34 = arith.truncf %33 : vector<8x4xf32> to vector<8x4xbf16>
    %c56 = arith.constant 56 : index
    %c0_28 = arith.constant 0 : index
    %35 = vector.load %arg13[%c56, %c0_28] : memref<72x4xbf16, #tpu.memory_space<vmem>>, vector<8x4xbf16>
    tpu.vector_store %arg13[%c56, %c0_28], %34 {strides = array<i32>} : memref<72x4xbf16, #tpu.memory_space<vmem>>, vector<8x4xbf16>,
    %c0_29 = arith.constant 0 : index
    %c0_30 = arith.constant 0 : index
    %c0_31 = arith.constant 0 : index
    %36 = vector.load %arg5[%c0_29, %c0_30, %c0_31] : memref<1x8x16xbf16, #tpu.memory_space<vmem>>, vector<1x8x16xbf16>
    %37 = vector.shape_cast %36 : vector<1x8x16xbf16> to vector<8x16xbf16>
    %c0_32 = arith.constant 0 : index
    %c0_33 = arith.constant 0 : index
    %38 = vector.load %arg6[%c0_32, %c0_33] : memref<16x4xbf16, #tpu.memory_space<vmem>>, vector<16x4xbf16>
    %cst_34 = arith.constant dense<0.000000e+00> : vector<8x4xf32>
    %39 = tpu.matmul %37, %38, %cst_34 {dimension_numbers = #tpu.dot_dimension_numbers<[1], [0], [0], [1], [0, 0, 1, 1], [], []>} : vector<8x16xbf16>, vector<16x4xbf16>, vector<8x4xf32> -> vector<8x4xf32>
    %c0_35 = arith.constant 0 : index
    %c0_36 = arith.constant 0 : index
    %40 = vector.load %arg7[%c0_35, %c0_36] : memref<1x4xf32, #tpu.memory_space<vmem>>, vector<1x4xf32>
    %41 = vector.broadcast %40 : vector<1x4xf32> to vector<8x4xf32>
    %42 = arith.addf %39, %41 : vector<8x4xf32>
    %cst_37 = arith.constant 1.000000e-01 : f32
    %43 = vector.broadcast %cst_37 : f32 to vector<8x4xf32>
    %44 = arith.mulf %43, %42 : vector<8x4xf32>
    %45 = arith.maximumf %42, %44 : vector<8x4xf32>
    %46 = arith.truncf %45 : vector<8x4xf32> to vector<8x4xbf16>
    %c64 = arith.constant 64 : index
    %c0_38 = arith.constant 0 : index
    %47 = vector.load %arg13[%c64, %c0_38] : memref<72x4xbf16, #tpu.memory_space<vmem>>, vector<8x4xbf16>
    tpu.vector_store %arg13[%c64, %c0_38], %46 {strides = array<i32>} : memref<72x4xbf16, #tpu.memory_space<vmem>>, vector<8x4xbf16>,
    %c0_39 = arith.constant 0 : index
    %c0_40 = arith.constant 0 : index
    %48 = vector.load %arg13[%c0_39, %c0_40] : memref<72x4xbf16, #tpu.memory_space<vmem>>, vector<48x4xbf16>
    %c0_41 = arith.constant 0 : index
    %c0_42 = arith.constant 0 : index
    %49 = vector.load %arg14[%c0_41, %c0_42] : memref<48x36xbf16, #tpu.memory_space<vmem>>, vector<48x4xbf16>
    tpu.vector_store %arg14[%c0_41, %c0_42], %48 {strides = array<i32>} : memref<48x36xbf16, #tpu.memory_space<vmem>>, vector<48x4xbf16>,
    %c1 = arith.constant 1 : index
    %c0_43 = arith.constant 0 : index
    %50 = vector.load %arg13[%c1, %c0_43] : memref<72x4xbf16, #tpu.memory_space<vmem>>, vector<48x4xbf16>
    %c0_44 = arith.constant 0 : index
    %c4 = arith.constant 4 : index
    %51 = vector.load %arg14[%c0_44, %c4] : memref<48x36xbf16, #tpu.memory_space<vmem>>, vector<48x4xbf16>
    tpu.vector_store %arg14[%c0_44, %c4], %50 {strides = array<i32>} : memref<48x36xbf16, #tpu.memory_space<vmem>>, vector<48x4xbf16>,
    %c2 = arith.constant 2 : index
    %c0_45 = arith.constant 0 : index
    %52 = vector.load %arg13[%c2, %c0_45] : memref<72x4xbf16, #tpu.memory_space<vmem>>, vector<48x4xbf16>
    %c0_46 = arith.constant 0 : index
    %c8 = arith.constant 8 : index
    %53 = vector.load %arg14[%c0_46, %c8] : memref<48x36xbf16, #tpu.memory_space<vmem>>, vector<48x4xbf16>
    tpu.vector_store %arg14[%c0_46, %c8], %52 {strides = array<i32>} : memref<48x36xbf16, #tpu.memory_space<vmem>>, vector<48x4xbf16>,
    %c8_47 = arith.constant 8 : index
    %c0_48 = arith.constant 0 : index
    %54 = vector.load %arg13[%c8_47, %c0_48] : memref<72x4xbf16, #tpu.memory_space<vmem>>, vector<48x4xbf16>
    %c0_49 = arith.constant 0 : index
    %c12 = arith.constant 12 : index
    %55 = vector.load %arg14[%c0_49, %c12] : memref<48x36xbf16, #tpu.memory_space<vmem>>, vector<48x4xbf16>
    tpu.vector_store %arg14[%c0_49, %c12], %54 {strides = array<i32>} : memref<48x36xbf16, #tpu.memory_space<vmem>>, vector<48x4xbf16>,
    %c9 = arith.constant 9 : index
    %c0_50 = arith.constant 0 : index
    %56 = vector.load %arg13[%c9, %c0_50] : memref<72x4xbf16, #tpu.memory_space<vmem>>, vector<48x4xbf16>
    %c0_51 = arith.constant 0 : index
    %c16 = arith.constant 16 : index
    %57 = vector.load %arg14[%c0_51, %c16] : memref<48x36xbf16, #tpu.memory_space<vmem>>, vector<48x4xbf16>
    tpu.vector_store %arg14[%c0_51, %c16], %56 {strides = array<i32>} : memref<48x36xbf16, #tpu.memory_space<vmem>>, vector<48x4xbf16>,
    %c10 = arith.constant 10 : index
    %c0_52 = arith.constant 0 : index
    %58 = vector.load %arg13[%c10, %c0_52] : memref<72x4xbf16, #tpu.memory_space<vmem>>, vector<48x4xbf16>
    %c0_53 = arith.constant 0 : index
    %c20 = arith.constant 20 : index
    %59 = vector.load %arg14[%c0_53, %c20] : memref<48x36xbf16, #tpu.memory_space<vmem>>, vector<48x4xbf16>
    tpu.vector_store %arg14[%c0_53, %c20], %58 {strides = array<i32>} : memref<48x36xbf16, #tpu.memory_space<vmem>>, vector<48x4xbf16>,
    %c16_54 = arith.constant 16 : index
    %c0_55 = arith.constant 0 : index
    %60 = vector.load %arg13[%c16_54, %c0_55] : memref<72x4xbf16, #tpu.memory_space<vmem>>, vector<48x4xbf16>
    %c0_56 = arith.constant 0 : index
    %c24 = arith.constant 24 : index
    %61 = vector.load %arg14[%c0_56, %c24] : memref<48x36xbf16, #tpu.memory_space<vmem>>, vector<48x4xbf16>
    tpu.vector_store %arg14[%c0_56, %c24], %60 {strides = array<i32>} : memref<48x36xbf16, #tpu.memory_space<vmem>>, vector<48x4xbf16>,
    %c17 = arith.constant 17 : index
    %c0_57 = arith.constant 0 : index
    %62 = vector.load %arg13[%c17, %c0_57] : memref<72x4xbf16, #tpu.memory_space<vmem>>, vector<48x4xbf16>
    %c0_58 = arith.constant 0 : index
    %c28 = arith.constant 28 : index
    %63 = vector.load %arg14[%c0_58, %c28] : memref<48x36xbf16, #tpu.memory_space<vmem>>, vector<48x4xbf16>
    tpu.vector_store %arg14[%c0_58, %c28], %62 {strides = array<i32>} : memref<48x36xbf16, #tpu.memory_space<vmem>>, vector<48x4xbf16>,
    %c18 = arith.constant 18 : index
    %c0_59 = arith.constant 0 : index
    %64 = vector.load %arg13[%c18, %c0_59] : memref<72x4xbf16, #tpu.memory_space<vmem>>, vector<48x4xbf16>
    %c0_60 = arith.constant 0 : index
    %c32 = arith.constant 32 : index
    %65 = vector.load %arg14[%c0_60, %c32] : memref<48x36xbf16, #tpu.memory_space<vmem>>, vector<48x4xbf16>
    tpu.vector_store %arg14[%c0_60, %c32], %64 {strides = array<i32>} : memref<48x36xbf16, #tpu.memory_space<vmem>>, vector<48x4xbf16>,
    %c0_61 = arith.constant 0 : index
    %c0_62 = arith.constant 0 : index
    %66 = vector.load %arg14[%c0_61, %c0_62] : memref<48x36xbf16, #tpu.memory_space<vmem>>, vector<48x36xbf16>
    %c0_63 = arith.constant 0 : index
    %c0_64 = arith.constant 0 : index
    %67 = vector.load %arg8[%c0_63, %c0_64] : memref<36x4xbf16, #tpu.memory_space<vmem>>, vector<36x4xbf16>
    %cst_65 = arith.constant dense<0.000000e+00> : vector<48x4xf32>
    %68 = tpu.matmul %66, %67, %cst_65 {dimension_numbers = #tpu.dot_dimension_numbers<[1], [0], [0], [1], [0, 0, 1, 1], [], []>} : vector<48x36xbf16>, vector<36x4xbf16>, vector<48x4xf32> -> vector<48x4xf32>
    %c0_66 = arith.constant 0 : index
    %c0_67 = arith.constant 0 : index
    %69 = vector.load %arg9[%c0_66, %c0_67] : memref<1x4xf32, #tpu.memory_space<vmem>>, vector<1x4xf32>
    %70 = vector.broadcast %69 : vector<1x4xf32> to vector<48x4xf32>
    %71 = arith.addf %68, %70 : vector<48x4xf32>
    %cst_68 = arith.constant 1.000000e-01 : f32
    %72 = vector.broadcast %cst_68 : f32 to vector<48x4xf32>
    %73 = arith.mulf %72, %71 : vector<48x4xf32>
    %74 = arith.maximumf %71, %73 : vector<48x4xf32>
    %75 = arith.truncf %74 : vector<48x4xf32> to vector<48x4xbf16>
    %c0_69 = arith.constant 0 : index
    %c0_70 = arith.constant 0 : index
    %76 = vector.load %arg10[%c0_69, %c0_70] : memref<4x16xbf16, #tpu.memory_space<vmem>>, vector<4x16xbf16>
    %cst_71 = arith.constant dense<0.000000e+00> : vector<48x16xf32>
    %77 = tpu.matmul %75, %76, %cst_71 {dimension_numbers = #tpu.dot_dimension_numbers<[1], [0], [0], [1], [0, 0, 1, 1], [], []>} : vector<48x4xbf16>, vector<4x16xbf16>, vector<48x16xf32> -> vector<48x16xf32>
    %c0_72 = arith.constant 0 : index
    %c0_73 = arith.constant 0 : index
    %78 = vector.load %arg11[%c0_72, %c0_73] : memref<1x16xf32, #tpu.memory_space<vmem>>, vector<1x16xf32>
    %79 = vector.broadcast %78 : vector<1x16xf32> to vector<48x16xf32>
    %80 = arith.addf %77, %79 : vector<48x16xf32>
    %cst_74 = arith.constant 1.000000e-01 : f32
    %81 = vector.broadcast %cst_74 : f32 to vector<48x16xf32>
    %82 = arith.mulf %81, %80 : vector<48x16xf32>
    %83 = arith.maximumf %80, %82 : vector<48x16xf32>
    %84 = vector.extract_strided_slice %83 {offsets = [0, 0], sizes = [39, 16], strides = [1, 1]} : vector<48x16xf32> to vector<39x16xf32>
    %c0_75 = arith.constant 0 : index
    %c9_76 = arith.constant 9 : index
    %c0_77 = arith.constant 0 : index
    %85 = vector.load %arg2[%c0_75, %c9_76, %c0_77] : memref<1x48x16xbf16, #tpu.memory_space<vmem>>, vector<1x39x16xbf16>
    %86 = vector.shape_cast %85 : vector<1x39x16xbf16> to vector<39x16xbf16>
    %87 = arith.extf %86 : vector<39x16xbf16> to vector<39x16xf32>
    %88 = arith.addf %84, %87 : vector<39x16xf32>
    %89 = arith.truncf %88 : vector<39x16xf32> to vector<39x16xbf16>
    %c0_78 = arith.constant 0 : index
    %c0_79 = arith.constant 0 : index
    %c0_80 = arith.constant 0 : index
    %90 = vector.load %arg12[%c0_78, %c0_79, %c0_80] : memref<1x48x16xbf16, #tpu.memory_space<vmem>>, vector<1x39x16xbf16>
    %91 = vector.shape_cast %90 : vector<1x39x16xbf16> to vector<39x16xbf16>
    %92 = vector.shape_cast %89 : vector<39x16xbf16> to vector<1x39x16xbf16>
    tpu.vector_store %arg12[%c0_78, %c0_79, %c0_80], %92 {strides = array<i32>} : memref<1x48x16xbf16, #tpu.memory_space<vmem>>, vector<1x39x16xbf16>,
    %93 = vector.extract_strided_slice %83 {offsets = [39, 0], sizes = [8, 16], strides = [1, 1]} : vector<48x16xf32> to vector<8x16xf32>
    %c0_81 = arith.constant 0 : index
    %c0_82 = arith.constant 0 : index
    %c0_83 = arith.constant 0 : index
    %94 = vector.load %arg3[%c0_81, %c0_82, %c0_83] : memref<1x8x16xbf16, #tpu.memory_space<vmem>>, vector<1x8x16xbf16>
    %95 = vector.shape_cast %94 : vector<1x8x16xbf16> to vector<8x16xbf16>
    %96 = arith.extf %95 : vector<8x16xbf16> to vector<8x16xf32>
    %97 = arith.addf %93, %96 : vector<8x16xf32>
    %98 = arith.truncf %97 : vector<8x16xf32> to vector<8x16xbf16>
    %c0_84 = arith.constant 0 : index
    %c39 = arith.constant 39 : index
    %c0_85 = arith.constant 0 : index
    %99 = vector.load %arg12[%c0_84, %c39, %c0_85] : memref<1x48x16xbf16, #tpu.memory_space<vmem>>, vector<1x8x16xbf16>
    %100 = vector.shape_cast %99 : vector<1x8x16xbf16> to vector<8x16xbf16>
    %101 = vector.shape_cast %98 : vector<8x16xbf16> to vector<1x8x16xbf16>
    tpu.vector_store %arg12[%c0_84, %c39, %c0_85], %101 {strides = array<i32>} : memref<1x48x16xbf16, #tpu.memory_space<vmem>>, vector<1x8x16xbf16>,
    %102 = vector.extract_strided_slice %83 {offsets = [47, 0], sizes = [1, 16], strides = [1, 1]} : vector<48x16xf32> to vector<1x16xf32>
    %c0_86 = arith.constant 0 : index
    %c0_87 = arith.constant 0 : index
    %c0_88 = arith.constant 0 : index
    %103 = vector.load %arg4[%c0_86, %c0_87, %c0_88] : memref<1x8x16xbf16, #tpu.memory_space<vmem>>, vector<1x1x16xbf16>
    %104 = vector.shape_cast %103 : vector<1x1x16xbf16> to vector<1x16xbf16>
    %105 = arith.extf %104 : vector<1x16xbf16> to vector<1x16xf32>
    %106 = arith.addf %102, %105 : vector<1x16xf32>
    %107 = arith.truncf %106 : vector<1x16xf32> to vector<1x16xbf16>
    %c0_89 = arith.constant 0 : index
    %c47 = arith.constant 47 : index
    %c0_90 = arith.constant 0 : index
    %108 = vector.load %arg12[%c0_89, %c47, %c0_90] : memref<1x48x16xbf16, #tpu.memory_space<vmem>>, vector<1x1x16xbf16>
    %109 = vector.shape_cast %108 : vector<1x1x16xbf16> to vector<1x16xbf16>
    %110 = vector.shape_cast %107 : vector<1x16xbf16> to vector<1x1x16xbf16>
    tpu.vector_store %arg12[%c0_89, %c47, %c0_90], %110 {strides = array<i32>} : memref<1x48x16xbf16, #tpu.memory_space<vmem>>, vector<1x1x16xbf16>,
    return
  }
  func.func @transform_0(%arg0: i32, %arg1: i32) -> (i32, i32, i32) {
    %c0_i32 = arith.constant 0 : i32
    %c0_i32_0 = arith.constant 0 : i32
    return %arg0, %arg1, %c0_i32 : i32, i32, i32
  }
  func.func @transform_1(%arg0: i32, %arg1: i32) -> (i32, i32, i32) {
    %c1_i32 = arith.constant 1 : i32
    %0 = arith.addi %arg1, %c1_i32 : i32
    %c6_i32 = arith.constant 6 : i32
    %1 = arith.muli %0, %c6_i32 : i32
    %c0_i32 = arith.constant 0 : i32
    %c0_i32_0 = arith.constant 0 : i32
    return %arg0, %1, %c0_i32 : i32, i32, i32
  }
  func.func @transform_2(%arg0: i32, %arg1: i32) -> (i32, i32, i32) {
    %c1_i32 = arith.constant 1 : i32
    %0 = arith.addi %arg1, %c1_i32 : i32
    %c6_i32 = arith.constant 6 : i32
    %1 = arith.muli %0, %c6_i32 : i32
    %c1_i32_0 = arith.constant 1 : i32
    %2 = arith.addi %1, %c1_i32_0 : i32
    %c0_i32 = arith.constant 0 : i32
    %c0_i32_1 = arith.constant 0 : i32
    return %arg0, %2, %c0_i32 : i32, i32, i32
  }
  func.func @transform_3(%arg0: i32, %arg1: i32) -> (i32, i32, i32) {
    %c1_i32 = arith.constant 1 : i32
    %0 = arith.addi %arg1, %c1_i32 : i32
    %c6_i32 = arith.constant 6 : i32
    %1 = arith.muli %0, %c6_i32 : i32
    %c2_i32 = arith.constant 2 : i32
    %2 = arith.addi %1, %c2_i32 : i32
    %c0_i32 = arith.constant 0 : i32
    %c0_i32_0 = arith.constant 0 : i32
    return %arg0, %2, %c0_i32 : i32, i32, i32
  }
  func.func @transform_4(%arg0: i32, %arg1: i32) -> (i32, i32) {
    %c0_i32 = arith.constant 0 : i32
    %c0_i32_0 = arith.constant 0 : i32
    %c0_i32_1 = arith.constant 0 : i32
    return %c0_i32, %c0_i32_0 : i32, i32
  }
  func.func @transform_5(%arg0: i32, %arg1: i32) -> (i32, i32) {
    %c0_i32 = arith.constant 0 : i32
    %c0_i32_0 = arith.constant 0 : i32
    %c0_i32_1 = arith.constant 0 : i32
    return %c0_i32, %c0_i32_0 : i32, i32
  }
  func.func @transform_6(%arg0: i32, %arg1: i32) -> (i32, i32) {
    %c0_i32 = arith.constant 0 : i32
    %c0_i32_0 = arith.constant 0 : i32
    %c0_i32_1 = arith.constant 0 : i32
    return %c0_i32, %c0_i32_0 : i32, i32
  }
  func.func @transform_7(%arg0: i32, %arg1: i32) -> (i32, i32) {
    %c0_i32 = arith.constant 0 : i32
    %c0_i32_0 = arith.constant 0 : i32
    %c0_i32_1 = arith.constant 0 : i32
    return %c0_i32, %c0_i32_0 : i32, i32
  }
  func.func @transform_8(%arg0: i32, %arg1: i32) -> (i32, i32) {
    %c0_i32 = arith.constant 0 : i32
    %c0_i32_0 = arith.constant 0 : i32
    %c0_i32_1 = arith.constant 0 : i32
    return %c0_i32, %c0_i32_0 : i32, i32
  }
  func.func @transform_9(%arg0: i32, %arg1: i32) -> (i32, i32) {
    %c0_i32 = arith.constant 0 : i32
    %c0_i32_0 = arith.constant 0 : i32
    %c0_i32_1 = arith.constant 0 : i32
    return %c0_i32, %c0_i32_0 : i32, i32
  }
  func.func @transform_10(%arg0: i32, %arg1: i32) -> (i32, i32, i32) {
    %c0_i32 = arith.constant 0 : i32
    %c0_i32_0 = arith.constant 0 : i32
    return %arg0, %arg1, %c0_i32 : i32, i32, i32
  }
}

</mosaic_0001>

<llo_original>
// kernel: unet_branch_forward.1
$region0: #{unet_branch_forward.1}
  #allocation0 [shape = 'u32[]', space=smem, size = 0x4, offset = 0x4, fixed_abs, tag = 'smem constant byte address 0x4 - core index']
  #allocation1 [shape = 'u32[144,128]{1,0:T(1,128)}', space=vmem, size = 0x12000, scoped, tag = 'internal scratch']
  #allocation2 [shape = 'bf16[72,4]{1,0:T(8,128)(2,1)}', space=vmem, size = 0x4800, scoped, tag = 'scratch operand']
  #allocation3 [shape = 'bf16[48,36]{1,0:T(8,128)(2,1)}', space=vmem, size = 0x3000, scoped, tag = 'scratch operand']
  %s0 = inlined_call_operand.vmem [shape: bf16[2,72,16], index: 0, kind: input, shape index: {}, may-alias: {0,1,2,3}]
  %s1 = inlined_call_operand.vmem [shape: bf16[2,72,16], index: 1, kind: input, shape index: {}, may-alias: {0,1,2,3}]
  %s2 = inlined_call_operand.vmem [shape: bf16[2,72,16], index: 2, kind: input, shape index: {}, may-alias: {0,1,2,3}]
  %s3 = inlined_call_operand.vmem [shape: bf16[2,72,16], index: 3, kind: input, shape index: {}, may-alias: {0,1,2,3}]
  %s4 = inlined_call_operand.vmem [shape: bf16[16,4], index: 4, kind: input, shape index: {}]
  %s5 = inlined_call_operand.vmem [shape: f32[1,4], index: 5, kind: input, shape index: {}]
  %s6 = inlined_call_operand.vmem [shape: bf16[36,4], index: 6, kind: input, shape index: {}]
  %s7 = inlined_call_operand.vmem [shape: f32[1,4], index: 7, kind: input, shape index: {}]
  %s8 = inlined_call_operand.vmem [shape: bf16[4,16], index: 8, kind: input, shape index: {}]
  %s9 = inlined_call_operand.vmem [shape: f32[1,16], index: 9, kind: input, shape index: {}]
  %s10 = inlined_call_operand.vmem [shape: bf16[2,48,16], index: 10, kind: output, shape index: {}]
  %s11 = sld [smem:[#allocation0]]
  $region73: #{unet_branch_forward.1} parent=0
    _
  %s13 = ssub.s32 1, %s11
  %s14 = scalar_select 0, %s13, %s11
  loop: start=0, step=1, limit=4
  $region2: #{unet_branch_forward.1} parent=0 // loop_pre_header
    _
  $region3: #{unet_branch_forward.1} parent=0 // loop_header
    %s16 = sphi 0, %s20
    %p17 = scmp.ge.s32.totalorder %s16, 4
    %s23 = sphi 0, %s35
    %s24 = sphi 0, %s31
    %s25 = sphi 0, %s23
    %s26 = sphi 0, %s24
    %s27 = sphi 0, %s25
    %s28 = sphi 0, %s26
    %s40 = sphi 0, %s42
    %s43 = sphi 0, %s40
    %s44 = sphi 0, %s43
    %s60 = sphi 0, %s44
    %s72 = sphi 0, %s74
    %s75 = sphi 0, %s72
    %s76 = sphi 0, %s75
    %s92 = sphi 0, %s76
    %s106 = sphi 0, %s108
    %s109 = sphi 0, %s106
    %s110 = sphi 0, %s109
    %s126 = sphi 0, %s110
    %s140 = sphi 0, %s142
    %s143 = sphi 0, %s140
    %s144 = sphi 0, %s143
    %s160 = sphi 0, %s144
    %s164 = sphi 0, %s164
    %s166 = sphi 0, %s164
    %s167 = sphi 0, %s166
    %s181 = sphi 0, %s167
    %s185 = sphi 0, %s185
    %s187 = sphi 0, %s185
    %s188 = sphi 0, %s187
    %s202 = sphi 0, %s188
    %s206 = sphi 0, %s206
    %s208 = sphi 0, %s206
    %s209 = sphi 0, %s208
    %s223 = sphi 0, %s209
    %s227 = sphi 0, %s227
    %s229 = sphi 0, %s227
    %s230 = sphi 0, %s229
    %s244 = sphi 0, %s230
    %s248 = sphi 0, %s248
    %s250 = sphi 0, %s248
    %s251 = sphi 0, %s250
    %s265 = sphi 0, %s251
    %s269 = sphi 0, %s269
    %s271 = sphi 0, %s269
    %s272 = sphi 0, %s271
    %s286 = sphi 0, %s272
    %s294 = sphi 0, %s296
    %s297 = sphi 0, %s294
    %s298 = sphi 0, %s297
    %s314 = sphi 0, %s298
  $region4: #{unet_branch_forward.1} parent=0 // loop_header_branch
    %19 = sbr.rel (%p17) target = $region8
  $region5: #{unet_branch_forward.1} parent=0 // loop_body
    %s21 = ssub.s32 %s16, 1
    %s22 = ssub.s32 %s16, 2
    %s29 = sadd.s32 1, %s24
    %p30 = scmp.ge.s32.totalorder %s29, 1
    %s31 = scalar_select %p30, 0, %s29
    %s32 = sadd.s32 1, %s23
    %s33 = scalar_select %p30, %s32, %s23
    %p34 = scmp.ge.s32.totalorder %s33, 2
    %s35 = scalar_select %p34, 0, %s33
    %s36 = ssub.s32 %s23, %s35
    %s37 = ssub.s32 %s24, %s31
    %s38 = sor.u32 %s36, %s37
    %p39 = scmp.eq.s32.totalorder %s38, 0
    %s41 = sadd.s32 %s40, 1
    %s42 = scalar_select %p39, %s40, %s41
    %p45 = pneg %p39
    %p46 = scmp.eq.s32.totalorder %s16, 1
    %p47 = por %p45, %p46
    %p48 = scmp.ne.s32.totalorder %s40, %s43
    %p49 = scmp.eq.s32.totalorder %s16, 0
    %p50 = por %p48, %p49
    %p51 = scmp.ne.s32.totalorder %s40, %s43
    %p52 = scmp.eq.s32.totalorder %s21, 1
    %p53 = por %p51, %p52
    %p54 = scmp.ne.s32.totalorder %s43, %s44
    %p55 = scmp.eq.s32.totalorder %s21, 0
    %p56 = por %p54, %p55
    %p57 = scmp.ne.s32.totalorder %s43, %s44
    %p58 = scmp.eq.s32.totalorder %s22, 1
    %p59 = por %p57, %p58
    %p61 = scmp.ne.s32.totalorder %s44, %s60
    %p62 = scmp.eq.s32.totalorder %s22, 0
    %p63 = por %p61, %p62
    %s64 = sadd.s32 %s24, 1
    %s65 = smul.u32 %s64, 6
    %s66 = sadd.s32 %s31, 1
    %s67 = smul.u32 %s66, 6
    %s68 = ssub.s32 %s23, %s35
    %s69 = ssub.s32 %s65, %s67
    %s70 = sor.u32 %s68, %s69
    %p71 = scmp.eq.s32.totalorder %s70, 0
    %s73 = sadd.s32 %s72, 1
    %s74 = scalar_select %p71, %s72, %s73
    %p77 = pneg %p71
    %p78 = scmp.eq.s32.totalorder %s16, 1
    %p79 = por %p77, %p78
    %p80 = scmp.ne.s32.totalorder %s72, %s75
    %p81 = scmp.eq.s32.totalorder %s16, 0
    %p82 = por %p80, %p81
    %p83 = scmp.ne.s32.totalorder %s72, %s75
    %p84 = scmp.eq.s32.totalorder %s21, 1
    %p85 = por %p83, %p84
    %p86 = scmp.ne.s32.totalorder %s75, %s76
    %p87 = scmp.eq.s32.totalorder %s21, 0
    %p88 = por %p86, %p87
    %p89 = scmp.ne.s32.totalorder %s75, %s76
    %p90 = scmp.eq.s32.totalorder %s22, 1
    %p91 = por %p89, %p90
    %p93 = scmp.ne.s32.totalorder %s76, %s92
    %p94 = scmp.eq.s32.totalorder %s22, 0
    %p95 = por %p93, %p94
    %s96 = sadd.s32 %s24, 1
    %s97 = smul.u32 %s96, 6
    %s98 = sadd.s32 %s97, 1
    %s99 = sadd.s32 %s31, 1
    %s100 = smul.u32 %s99, 6
    %s101 = sadd.s32 %s100, 1
    %s102 = ssub.s32 %s23, %s35
    %s103 = ssub.s32 %s98, %s101
    %s104 = sor.u32 %s102, %s103
    %p105 = scmp.eq.s32.totalorder %s104, 0
    %s107 = sadd.s32 %s106, 1
    %s108 = scalar_select %p105, %s106, %s107
    %p111 = pneg %p105
    %p112 = scmp.eq.s32.totalorder %s16, 1
    %p113 = por %p111, %p112
    %p114 = scmp.ne.s32.totalorder %s106, %s109
    %p115 = scmp.eq.s32.totalorder %s16, 0
    %p116 = por %p114, %p115
    %p117 = scmp.ne.s32.totalorder %s106, %s109
    %p118 = scmp.eq.s32.totalorder %s21, 1
    %p119 = por %p117, %p118
    %p120 = scmp.ne.s32.totalorder %s109, %s110
    %p121 = scmp.eq.s32.totalorder %s21, 0
    %p122 = por %p120, %p121
    %p123 = scmp.ne.s32.totalorder %s109, %s110
    %p124 = scmp.eq.s32.totalorder %s22, 1
    %p125 = por %p123, %p124
    %p127 = scmp.ne.s32.totalorder %s110, %s126
    %p128 = scmp.eq.s32.totalorder %s22, 0
    %p129 = por %p127, %p128
    %s130 = sadd.s32 %s24, 1
    %s131 = smul.u32 %s130, 6
    %s132 = sadd.s32 %s131, 2
    %s133 = sadd.s32 %s31, 1
    %s134 = smul.u32 %s133, 6
    %s135 = sadd.s32 %s134, 2
    %s136 = ssub.s32 %s23, %s35
    %s137 = ssub.s32 %s132, %s135
    %s138 = sor.u32 %s136, %s137
    %p139 = scmp.eq.s32.totalorder %s138, 0
    %s141 = sadd.s32 %s140, 1
    %s142 = scalar_select %p139, %s140, %s141
    %p145 = pneg %p139
    %p146 = scmp.eq.s32.totalorder %s16, 1
    %p147 = por %p145, %p146
    %p148 = scmp.ne.s32.totalorder %s140, %s143
    %p149 = scmp.eq.s32.totalorder %s16, 0
    %p150 = por %p148, %p149
    %p151 = scmp.ne.s32.totalorder %s140, %s143
    %p152 = scmp.eq.s32.totalorder %s21, 1
    %p153 = por %p151, %p152
    %p154 = scmp.ne.s32.totalorder %s143, %s144
    %p155 = scmp.eq.s32.totalorder %s21, 0
    %p156 = por %p154, %p155
    %p157 = scmp.ne.s32.totalorder %s143, %s144
    %p158 = scmp.eq.s32.totalorder %s22, 1
    %p159 = por %p157, %p158
    %p161 = scmp.ne.s32.totalorder %s144, %s160
    %p162 = scmp.eq.s32.totalorder %s22, 0
    %p163 = por %p161, %p162
    %s165 = sadd.s32 %s164, 1
    %p168 = scmp.eq.s32.totalorder %s16, 1
    %p169 = scmp.ne.s32.totalorder %s164, %s166
    %p170 = scmp.eq.s32.totalorder %s16, 0
    %p171 = por %p169, %p170
    %p172 = scmp.ne.s32.totalorder %s164, %s166
    %p173 = scmp.eq.s32.totalorder %s21, 1
    %p174 = por %p172, %p173
    %p175 = scmp.ne.s32.totalorder %s166, %s167
    %p176 = scmp.eq.s32.totalorder %s21, 0
    %p177 = por %p175, %p176
    %p178 = scmp.ne.s32.totalorder %s166, %s167
    %p179 = scmp.eq.s32.totalorder %s22, 1
    %p180 = por %p178, %p179
    %p182 = scmp.ne.s32.totalorder %s167, %s181
    %p183 = scmp.eq.s32.totalorder %s22, 0
    %p184 = por %p182, %p183
    %s186 = sadd.s32 %s185, 1
    %p189 = scmp.eq.s32.totalorder %s16, 1
    %p190 = scmp.ne.s32.totalorder %s185, %s187
    %p191 = scmp.eq.s32.totalorder %s16, 0
    %p192 = por %p190, %p191
    %p193 = scmp.ne.s32.totalorder %s185, %s187
    %p194 = scmp.eq.s32.totalorder %s21, 1
    %p195 = por %p193, %p194
    %p196 = scmp.ne.s32.totalorder %s187, %s188
    %p197 = scmp.eq.s32.totalorder %s21, 0
    %p198 = por %p196, %p197
    %p199 = scmp.ne.s32.totalorder %s187, %s188
    %p200 = scmp.eq.s32.totalorder %s22, 1
    %p201 = por %p199, %p200
    %p203 = scmp.ne.s32.totalorder %s188, %s202
    %p204 = scmp.eq.s32.totalorder %s22, 0
    %p205 = por %p203, %p204
    %s207 = sadd.s32 %s206, 1
    %p210 = scmp.eq.s32.totalorder %s16, 1
    %p211 = scmp.ne.s32.totalorder %s206, %s208
    %p212 = scmp.eq.s32.totalorder %s16, 0
    %p213 = por %p211, %p212
    %p214 = scmp.ne.s32.totalorder %s206, %s208
    %p215 = scmp.eq.s32.totalorder %s21, 1
    %p216 = por %p214, %p215
    %p217 = scmp.ne.s32.totalorder %s208, %s209
    %p218 = scmp.eq.s32.totalorder %s21, 0
    %p219 = por %p217, %p218
    %p220 = scmp.ne.s32.totalorder %s208, %s209
    %p221 = scmp.eq.s32.totalorder %s22, 1
    %p222 = por %p220, %p221
    %p224 = scmp.ne.s32.totalorder %s209, %s223
    %p225 = scmp.eq.s32.totalorder %s22, 0
    %p226 = por %p224, %p225
    %s228 = sadd.s32 %s227, 1
    %p231 = scmp.eq.s32.totalorder %s16, 1
    %p232 = scmp.ne.s32.totalorder %s227, %s229
    %p233 = scmp.eq.s32.totalorder %s16, 0
    %p234 = por %p232, %p233
    %p235 = scmp.ne.s32.totalorder %s227, %s229
    %p236 = scmp.eq.s32.totalorder %s21, 1
    %p237 = por %p235, %p236
    %p238 = scmp.ne.s32.totalorder %s229, %s230
    %p239 = scmp.eq.s32.totalorder %s21, 0
    %p240 = por %p238, %p239
    %p241 = scmp.ne.s32.totalorder %s229, %s230
    %p242 = scmp.eq.s32.totalorder %s22, 1
    %p243 = por %p241, %p242
    %p245 = scmp.ne.s32.totalorder %s230, %s244
    %p246 = scmp.eq.s32.totalorder %s22, 0
    %p247 = por %p245, %p246
    %s249 = sadd.s32 %s248, 1
    %p252 = scmp.eq.s32.totalorder %s16, 1
    %p253 = scmp.ne.s32.totalorder %s248, %s250
    %p254 = scmp.eq.s32.totalorder %s16, 0
    %p255 = por %p253, %p254
    %p256 = scmp.ne.s32.totalorder %s248, %s250
    %p257 = scmp.eq.s32.totalorder %s21, 1
    %p258 = por %p256, %p257
    %p259 = scmp.ne.s32.totalorder %s250, %s251
    %p260 = scmp.eq.s32.totalorder %s21, 0
    %p261 = por %p259, %p260
    %p262 = scmp.ne.s32.totalorder %s250, %s251
    %p263 = scmp.eq.s32.totalorder %s22, 1
    %p264 = por %p262, %p263
    %p266 = scmp.ne.s32.totalorder %s251, %s265
    %p267 = scmp.eq.s32.totalorder %s22, 0
    %p268 = por %p266, %p267
    %s270 = sadd.s32 %s269, 1
    %p273 = scmp.eq.s32.totalorder %s16, 1
    %p274 = scmp.ne.s32.totalorder %s269, %s271
    %p275 = scmp.eq.s32.totalorder %s16, 0
    %p276 = por %p274, %p275
    %p277 = scmp.ne.s32.totalorder %s269, %s271
    %p278 = scmp.eq.s32.totalorder %s21, 1
    %p279 = por %p277, %p278
    %p280 = scmp.ne.s32.totalorder %s271, %s272
    %p281 = scmp.eq.s32.totalorder %s21, 0
    %p282 = por %p280, %p281
    %p283 = scmp.ne.s32.totalorder %s271, %s272
    %p284 = scmp.eq.s32.totalorder %s22, 1
    %p285 = por %p283, %p284
    %p287 = scmp.ne.s32.totalorder %s272, %s286
    %p288 = scmp.eq.s32.totalorder %s22, 0
    %p289 = por %p287, %p288
    %s290 = ssub.s32 %s23, %s35
    %s291 = ssub.s32 %s24, %s31
    %s292 = sor.u32 %s290, %s291
    %p293 = scmp.eq.s32.totalorder %s292, 0
    %s295 = sadd.s32 %s294, 1
    %s296 = scalar_select %p293, %s294, %s295
    %p299 = pneg %p293
    %p300 = scmp.eq.s32.totalorder %s16, 1
    %p301 = por %p299, %p300
    %p302 = scmp.ne.s32.totalorder %s294, %s297
    %p303 = scmp.eq.s32.totalorder %s16, 0
    %p304 = por %p302, %p303
    %p305 = scmp.ne.s32.totalorder %s294, %s297
    %p306 = scmp.eq.s32.totalorder %s21, 1
    %p307 = por %p305, %p306
    %p308 = scmp.ne.s32.totalorder %s297, %s298
    %p309 = scmp.eq.s32.totalorder %s21, 0
    %p310 = por %p308, %p309
    %p311 = scmp.ne.s32.totalorder %s297, %s298
    %p312 = scmp.eq.s32.totalorder %s22, 1
    %p313 = por %p311, %p312
    %p315 = scmp.ne.s32.totalorder %s298, %s314
    %p316 = scmp.eq.s32.totalorder %s22, 0
    %p317 = por %p315, %p316
    %p318 = scmp.le.s32.totalorder 1, %s16
    %p319 = scmp.lt.s32.totalorder %s16, 3
    %p320 = pnand %p318, %p319
    %p321 = pneg %p320
    // Predicated region
    $region9: #{unet_branch_forward.1} parent=5 // pred_check
      _
    $region10: #{unet_branch_forward.1} parent=5 // pred_check_branch
      %323 = sbr.rel (%p320) target = $region12
    $region11: #{unet_branch_forward.1} parent=5 // pred_region
      %s324 = ssub.s32 %s16, 1
      // Predicated region
      $region13: #{unet_branch_forward.1} parent=11 // pred_check
        %p325 = pneg %p177
      $region14: #{unet_branch_forward.1} parent=11 // pred_check_branch
        %327 = sbr.rel (%p325) target = $region16
      $region15: #{unet_branch_forward.1} parent=11 // pred_region
        _
      $region16: #{unet_branch_forward.1} parent=11 // pred_fallthru
        _
      // Predicated region
      $region17: #{unet_branch_forward.1} parent=11 // pred_check
        %p328 = pneg %p198
      $region18: #{unet_branch_forward.1} parent=11 // pred_check_branch
        %330 = sbr.rel (%p328) target = $region20
      $region19: #{unet_branch_forward.1} parent=11 // pred_region
        _
      $region20: #{unet_branch_forward.1} parent=11 // pred_fallthru
        _
      // Predicated region
      $region21: #{unet_branch_forward.1} parent=11 // pred_check
        %p331 = pneg %p219
      $region22: #{unet_branch_forward.1} parent=11 // pred_check_branch
        %333 = sbr.rel (%p331) target = $region24
      $region23: #{unet_branch_forward.1} parent=11 // pred_region
        _
      $region24: #{unet_branch_forward.1} parent=11 // pred_fallthru
        _
      // Predicated region
      $region25: #{unet_branch_forward.1} parent=11 // pred_check
        %p334 = pneg %p240
      $region26: #{unet_branch_forward.1} parent=11 // pred_check_branch
        %336 = sbr.rel (%p334) target = $region28
      $region27: #{unet_branch_forward.1} parent=11 // pred_region
        _
      $region28: #{unet_branch_forward.1} parent=11 // pred_fallthru
        _
      // Predicated region
      $region29: #{unet_branch_forward.1} parent=11 // pred_check
        %p337 = pneg %p261
      $region30: #{unet_branch_forward.1} parent=11 // pred_check_branch
        %339 = sbr.rel (%p337) target = $region32
      $region31: #{unet_branch_forward.1} parent=11 // pred_region
        _
      $region32: #{unet_branch_forward.1} parent=11 // pred_fallthru
        _
      // Predicated region
      $region33: #{unet_branch_forward.1} parent=11 // pred_check
        %p340 = pneg %p282
      $region34: #{unet_branch_forward.1} parent=11 // pred_check_branch
        %342 = sbr.rel (%p340) target = $region36
      $region35: #{unet_branch_forward.1} parent=11 // pred_region
        _
      $region36: #{unet_branch_forward.1} parent=11 // pred_fallthru
        _
    $region12: #{unet_branch_forward.1} parent=5 // pred_fallthru
      _
    %p343 = scmp.lt.s32.totalorder %s16, 2
    // Predicated region
    $region37: #{unet_branch_forward.1} parent=5 // pred_check
      %p344 = pneg %p343
    $region38: #{unet_branch_forward.1} parent=5 // pred_check_branch
      %346 = sbr.rel (%p344) target = $region40
    $region39: #{unet_branch_forward.1} parent=5 // pred_region
      // Predicated region
      $region41: #{unet_branch_forward.1} parent=39 // pred_check
        %p347 = pneg %p50
      $region42: #{unet_branch_forward.1} parent=39 // pred_check_branch
        %349 = sbr.rel (%p347) target = $region44
      $region43: #{unet_branch_forward.1} parent=39 // pred_region
        %s350 = smul.u32 6, %s24
        %s351 = ssub.s32 9, %s350
        %p352 = scmp.lt.s32.totalorder %s351, 6
        %s353 = scalar_select %p352, %s351, 6
        %s354 = smul.u32 64, %s353
        %p355 = scmp.lt.s32.totalorder %s23, 1
        %s356 = scalar_select %p355, %s23, 1
        %p357 = scmp.lt.s32.totalorder %s350, 8
        %s358 = scalar_select %p357, %s350, 8
        %s359 = smul.addr %s356, 9
        %s360 = sadd.s32 %s358, %s359
        %s361 = smul.addr %s360, 4
        %s362 = scalar_lea.vmem %s0, %s361
        %s363 = smul.u32 6, %s24
        %s364 = ssub.s32 9, %s363
        %p365 = scmp.lt.s32.totalorder %s364, 6
        %s366 = scalar_select %p365, %s364, 6
        %s367 = smul.u32 64, %s366
      $region44: #{unet_branch_forward.1} parent=39 // pred_fallthru
        _
      // Predicated region
      $region45: #{unet_branch_forward.1} parent=39 // pred_check
        %p368 = pneg %p82
      $region46: #{unet_branch_forward.1} parent=39 // pred_check_branch
        %370 = sbr.rel (%p368) target = $region48
      $region47: #{unet_branch_forward.1} parent=39 // pred_region
        %s371 = sadd.s32 %s24, 1
        %s372 = smul.u32 %s371, 6
        %p373 = scmp.lt.s32.totalorder %s23, 1
        %s374 = scalar_select %p373, %s23, 1
        %p375 = scmp.lt.s32.totalorder %s372, 8
        %s376 = scalar_select %p375, %s372, 8
        %s377 = smul.addr %s374, 9
        %s378 = sadd.s32 %s376, %s377
        %s379 = smul.addr %s378, 4
        %s380 = scalar_lea.vmem %s1, %s379
        %s381 = sadd.s32 %s24, 1
        %s382 = smul.u32 %s381, 6
      $region48: #{unet_branch_forward.1} parent=39 // pred_fallthru
        _
      // Predicated region
      $region49: #{unet_branch_forward.1} parent=39 // pred_check
        %p383 = pneg %p116
      $region50: #{unet_branch_forward.1} parent=39 // pred_check_branch
        %385 = sbr.rel (%p383) target = $region52
      $region51: #{unet_branch_forward.1} parent=39 // pred_region
        %s386 = sadd.s32 %s24, 1
        %s387 = smul.u32 %s386, 6
        %s388 = sadd.s32 %s387, 1
        %p389 = scmp.lt.s32.totalorder %s23, 1
        %s390 = scalar_select %p389, %s23, 1
        %p391 = scmp.lt.s32.totalorder %s388, 8
        %s392 = scalar_select %p391, %s388, 8
        %s393 = smul.addr %s390, 9
        %s394 = sadd.s32 %s392, %s393
        %s395 = smul.addr %s394, 4
        %s396 = scalar_lea.vmem %s2, %s395
        %s397 = sadd.s32 %s24, 1
        %s398 = smul.u32 %s397, 6
        %s399 = sadd.s32 %s398, 1
      $region52: #{unet_branch_forward.1} parent=39 // pred_fallthru
        _
      // Predicated region
      $region53: #{unet_branch_forward.1} parent=39 // pred_check
        %p400 = pneg %p150
      $region54: #{unet_branch_forward.1} parent=39 // pred_check_branch
        %402 = sbr.rel (%p400) target = $region56
      $region55: #{unet_branch_forward.1} parent=39 // pred_region
        %s403 = sadd.s32 %s24, 1
        %s404 = smul.u32 %s403, 6
        %s405 = sadd.s32 %s404, 2
        %p406 = scmp.lt.s32.totalorder %s23, 1
        %s407 = scalar_select %p406, %s23, 1
        %p408 = scmp.lt.s32.totalorder %s405, 8
        %s409 = scalar_select %p408, %s405, 8
        %s410 = smul.addr %s407, 9
        %s411 = sadd.s32 %s409, %s410
        %s412 = smul.addr %s411, 4
        %s413 = scalar_lea.vmem %s3, %s412
        %s414 = sadd.s32 %s24, 1
        %s415 = smul.u32 %s414, 6
        %s416 = sadd.s32 %s415, 2
      $region56: #{unet_branch_forward.1} parent=39 // pred_fallthru
        _
    $region40: #{unet_branch_forward.1} parent=5 // pred_fallthru
      _
    %p417 = scmp.le.s32.totalorder 1, %s16
    %p418 = scmp.lt.s32.totalorder %s16, 3
    %p419 = pnand %p417, %p418
    %p420 = pneg %p419
    // Predicated region
    $region57: #{unet_branch_forward.1} parent=5 // pred_check
      _
    $region58: #{unet_branch_forward.1} parent=5 // pred_check_branch
      %422 = sbr.rel (%p419) target = $region60
    $region59: #{unet_branch_forward.1} parent=5 // pred_region
      %s423 = ssub.s32 %s16, 1
      %s424 = smul.u32 6, %s26
      %s425 = ssub.s32 9, %s424
      %p426 = scmp.lt.s32.totalorder %s425, 6
      %s427 = scalar_select %p426, %s425, 6
      %s428 = smul.u32 64, %s427
      %p429 = scmp.lt.s32.totalorder %s25, 1
      %s430 = scalar_select %p429, %s25, 1
      %p431 = scmp.lt.s32.totalorder %s424, 8
      %s432 = scalar_select %p431, %s424, 8
      %s433 = smul.addr %s430, 9
      %s434 = sadd.s32 %s432, %s433
      %s435 = smul.addr %s434, 4
      %s436 = scalar_lea.vmem %s0, %s435
      %p437 = pneg %p56
      %p438 = pneg %p53
      %s439 = sadd.s32 %s26, 1
      %s440 = smul.u32 %s439, 6
      %p441 = scmp.lt.s32.totalorder %s25, 1
      %s442 = scalar_select %p441, %s25, 1
      %p443 = scmp.lt.s32.totalorder %s440, 8
      %s444 = scalar_select %p443, %s440, 8
      %s445 = smul.addr %s442, 9
      %s446 = sadd.s32 %s444, %s445
      %s447 = smul.addr %s446, 4
      %s448 = scalar_lea.vmem %s1, %s447
      %p449 = pneg %p88
      %p450 = pneg %p85
      %s451 = sadd.s32 %s26, 1
      %s452 = smul.u32 %s451, 6
      %s453 = sadd.s32 %s452, 1
      %p454 = scmp.lt.s32.totalorder %s25, 1
      %s455 = scalar_select %p454, %s25, 1
      %p456 = scmp.lt.s32.totalorder %s453, 8
      %s457 = scalar_select %p456, %s453, 8
      %s458 = smul.addr %s455, 9
      %s459 = sadd.s32 %s457, %s458
      %s460 = smul.addr %s459, 4
      %s461 = scalar_lea.vmem %s2, %s460
      %p462 = pneg %p122
      %p463 = pneg %p119
      %s464 = sadd.s32 %s26, 1
      %s465 = smul.u32 %s464, 6
      %s466 = sadd.s32 %s465, 2
      %p467 = scmp.lt.s32.totalorder %s25, 1
      %s468 = scalar_select %p467, %s25, 1
      %p469 = scmp.lt.s32.totalorder %s466, 8
      %s470 = scalar_select %p469, %s466, 8
      %s471 = smul.addr %s468, 9
      %s472 = sadd.s32 %s470, %s471
      %s473 = smul.addr %s472, 4
      %s474 = scalar_lea.vmem %s3, %s473
      %p475 = pneg %p156
      %p476 = pneg %p153
      %p477 = pneg %p177
      %p478 = pneg %p174
      %p479 = pneg %p198
      %p480 = pneg %p195
      %p481 = pneg %p219
      %p482 = pneg %p216
      %p483 = pneg %p240
      %p484 = pneg %p237
      %p485 = pneg %p261
      %p486 = pneg %p258
      %p487 = pneg %p282
      %p488 = pneg %p279
      %p489 = pneg %p310
      %p490 = pneg %p307
      %s491 = smul.u32 6, %s26
      %p492 = scmp.lt.s32.totalorder %s25, 1
      %s493 = scalar_select %p492, %s25, 1
      %p494 = scmp.lt.s32.totalorder %s491, 5
      %s495 = scalar_select %p494, %s491, 5
      %s496 = smul.addr %s493, 6
      %s497 = sadd.s32 %s495, %s496
      %s498 = smul.addr %s497, 4
      %s499 = scalar_lea.vmem %s10, %s498
      %s500 = smul.u32 6, %s26
      %s501 = ssub.s32 9, %s500
      %p502 = scmp.lt.s32.totalorder %s501, 6
      %s503 = scalar_select %p502, %s501, 6
      %s504 = smul.u32 64, %s503
      %p505 = scmp.lt.s32.totalorder %s25, 1
      %s506 = scalar_select %p505, %s25, 1
      %p507 = scmp.lt.s32.totalorder %s500, 8
      %s508 = scalar_select %p507, %s500, 8
      %s509 = smul.addr %s506, 9
      %s510 = sadd.s32 %s508, %s509
      %s511 = smul.addr %s510, 4
      %s512 = scalar_lea.vmem %s0, %s511
      %s513 = smul.u32 6, %s26
      %s514 = ssub.s32 9, %s513
      %p515 = scmp.lt.s32.totalorder %s514, 6
      %s516 = scalar_select %p515, %s514, 6
      %s517 = smul.u32 64, %s516
      %s518 = sadd.s32 %s26, 1
      %s519 = smul.u32 %s518, 6
      %p520 = scmp.lt.s32.totalorder %s25, 1
      %s521 = scalar_select %p520, %s25, 1
      %p522 = scmp.lt.s32.totalorder %s519, 8
      %s523 = scalar_select %p522, %s519, 8
      %s524 = smul.addr %s521, 9
      %s525 = sadd.s32 %s523, %s524
      %s526 = smul.addr %s525, 4
      %s527 = scalar_lea.vmem %s1, %s526
      %s528 = sadd.s32 %s26, 1
      %s529 = smul.u32 %s528, 6
      %s530 = sadd.s32 %s26, 1
      %s531 = smul.u32 %s530, 6
      %s532 = sadd.s32 %s531, 1
      %p533 = scmp.lt.s32.totalorder %s25, 1
      %s534 = scalar_select %p533, %s25, 1
      %p535 = scmp.lt.s32.totalorder %s532, 8
      %s536 = scalar_select %p535, %s532, 8
      %s537 = smul.addr %s534, 9
      %s538 = sadd.s32 %s536, %s537
      %s539 = smul.addr %s538, 4
      %s540 = scalar_lea.vmem %s2, %s539
      %s541 = sadd.s32 %s26, 1
      %s542 = smul.u32 %s541, 6
      %s543 = sadd.s32 %s542, 1
      %s544 = sadd.s32 %s26, 1
      %s545 = smul.u32 %s544, 6
      %s546 = sadd.s32 %s545, 2
      %p547 = scmp.lt.s32.totalorder %s25, 1
      %s548 = scalar_select %p547, %s25, 1
      %p549 = scmp.lt.s32.totalorder %s546, 8
      %s550 = scalar_select %p549, %s546, 8
      %s551 = smul.addr %s548, 9
      %s552 = sadd.s32 %s550, %s551
      %s553 = smul.addr %s552, 4
      %s554 = scalar_lea.vmem %s3, %s553
      %s555 = sadd.s32 %s26, 1
      %s556 = smul.u32 %s555, 6
      %s557 = sadd.s32 %s556, 2
      %s558 = smul.u32 6, %s26
      %p559 = scmp.lt.s32.totalorder %s25, 1
      %s560 = scalar_select %p559, %s25, 1
      %p561 = scmp.lt.s32.totalorder %s558, 5
      %s562 = scalar_select %p561, %s558, 5
      %s563 = smul.addr %s560, 6
      %s564 = sadd.s32 %s562, %s563
      %s565 = smul.addr %s564, 4
      %s566 = scalar_lea.vmem %s10, %s565
      %s567 = smul.u32 6, %s26
      %v569 = vld [vmem:[%s512] sm:$0xf]
      %v570 = vld [vmem:[%s512 + $0x4] sm:$0xf]
      %v571 = vld [vmem:[%s512 + $0x8] sm:$0xf]
      %v572 = vld [vmem:[%s512 + $0xc] sm:$0xf]
      %v573 = vld [vmem:[%s512 + $0x10] sm:$0xf]
      %v574 = vld [vmem:[%s512 + $0x14] sm:$0xf]
      %v575 = vld [vmem:[%s4] sm:$0xf]
      %v576 = vld [vmem:[%s4 + $0x4] sm:$0xf]
      %v577 = vld [vmem:[%s5] sm:$0x1]
      %v579 = vlaneseq
      %v580 = vshrl.u32 %v579, 7
      %v581 = vsub.s32 0, %v580
      %v582 = vrot.slane %v577, %v581
      %v590 = vunpack.c.l.b16 %v569
      %v591 = vunpack.c.l.b16 %v570
      %v592 = vunpack.c.l.b16 %v571
      %v593 = vunpack.c.l.b16 %v572
      %v594 = vunpack.c.l.b16 %v573
      %v595 = vunpack.c.l.b16 %v574
      %v596 = vpack.c.b16 %v591, %v590
      %v597 = vpack.c.b16 %v593, %v592
      %v598 = vpack.c.b16 %v595, %v594
      %v601 = vunpack.c.l.b16 %v575
      %v602 = vunpack.c.l.b16 %v576
      %v603 = vpack.c.b16 %v602, %v601
      %vm605 = vcmask 130048
      %v607 = vsel %vm605, %v596, 0
      %v610 = vsel %vm605, %v597, 0
      %v613 = vsel %vm605, %v598, 0
      %615 = vmatprep.subr.bf16.mxu0 0
      %616 = vmatpush1.bf16.msra.mxu0 0
      %617 = vmatprep.subr.bf16.mxu0 0
      %618 = vmatpush1.bf16.msra.mxu0 0
      %619 = vmatprep.subr.bf16.mxu0 0
      %620 = vmatpush1.bf16.msra.mxu0 0
      %621 = vmatprep.subr.bf16.mxu0 0
      %622 = vmatpush1.bf16.msra.mxu0 0
      %623 = vmatprep.subr.bf16.mxu0 0
      %624 = vmatpush1.bf16.msra.mxu0 0
      %625 = vmatprep.subr.bf16.mxu0 0
      %626 = vmatpush1.bf16.msra.mxu0 0
      %627 = vmatprep.subr.bf16.mxu0 0
      %628 = vmatpush1.bf16.msra.mxu0 0
      %629 = vmatprep.subr.bf16.mxu0 0
      %630 = vmatpush1.bf16.msra.mxu0 %v603
      %631 = vmatprep.subr.bf16.mxu0 0
      %632 = vmatpush2.bf16.msra.mxu0 0
      %633 = vmatprep.subr.bf16.mxu0 0
      %634 = vmatpush2.bf16.msra.mxu0 0
      %635 = vmatprep.subr.bf16.mxu0 0
      %636 = vmatpush2.bf16.msra.mxu0 0
      %637 = vmatprep.subr.bf16.mxu0 0
      %638 = vmatpush2.bf16.msra.mxu0 0
      %639 = vmatprep.subr.bf16.mxu0 0
      %640 = vmatpush2.bf16.msra.mxu0 0
      %641 = vmatprep.subr.bf16.mxu0 0
      %642 = vmatpush2.bf16.msra.mxu0 0
      %643 = vmatprep.subr.bf16.mxu0 0
      %644 = vmatpush2.bf16.msra.mxu0 0
      %645 = vmatprep.subr.bf16.mxu0 0
      %646 = vmatpush2.bf16.msra.mxu0 0
      %647 = vmatprep.mubr.bf16.mxu0 0
      %648 = vmatmul.mubr.bf16.gmra.mxu0 %v607
      %v649 = vpop.f32.mrf.mxu0
      %v650 = vadd.f32 %v582, %v649
      %v651 = vpop.f32.mrf.mxu0
      %v652 = vpop.f32.mrf.mxu0
      %v653 = vadd.f32 %v582, %v652
      %v654 = vpop.f32.mrf.mxu0
      %655 = vmatprep.mubr.bf16.mxu0 0
      %656 = vmatmul.mubr.bf16.gmra.mxu0 %v610
      %v657 = vpop.f32.mrf.mxu0
      %v658 = vadd.f32 %v582, %v657
      %v659 = vpop.f32.mrf.mxu0
      %v660 = vpop.f32.mrf.mxu0
      %v661 = vadd.f32 %v582, %v660
      %v662 = vpop.f32.mrf.mxu0
      %663 = vmatprep.mubr.bf16.mxu0 0
      %664 = vmatmul.mubr.bf16.gmra.mxu0 %v613
      %v665 = vpop.f32.mrf.mxu0
      %v666 = vadd.f32 %v582, %v665
      %v667 = vpop.f32.mrf.mxu0
      %v668 = vpop.f32.mrf.mxu0
      %v669 = vadd.f32 %v582, %v668
      %v670 = vpop.f32.mrf.mxu0
      %671 = vdwg.mxu0
      %v672 = vmul.f32 %v650, 0.1
      %v673 = vmul.f32 %v653, 0.1
      %v674 = vmul.f32 %v658, 0.1
      %v675 = vmul.f32 %v661, 0.1
      %v676 = vmul.f32 %v666, 0.1
      %v677 = vmul.f32 %v669, 0.1
      %v678 = vmax.f32 %v650, %v672
      %v679 = vmax.f32 %v653, %v673
      %v680 = vmax.f32 %v658, %v674
      %v681 = vmax.f32 %v661, %v675
      %v682 = vmax.f32 %v666, %v676
      %v683 = vmax.f32 %v669, %v677
      %v684 = vpack.c.bf16 %v679, %v678
      %v685 = vpack.c.bf16 %v681, %v680
      %v686 = vpack.c.bf16 %v683, %v682
      %v690 = vunpack.c.l.b16 %v684
      %v691 = vunpack.c.h.b16 %v684
      %v692 = vunpack.c.l.b16 %v685
      %v693 = vunpack.c.h.b16 %v685
      %v694 = vunpack.c.l.b16 %v686
      %v695 = vunpack.c.h.b16 %v686
      %v696 = vpack.c.b16 %v690, %v690
      %v697 = vpack.c.b16 %v691, %v691
      %v698 = vpack.c.b16 %v692, %v692
      %v699 = vpack.c.b16 %v693, %v693
      %v700 = vpack.c.b16 %v694, %v694
      %v701 = vpack.c.b16 %v695, %v695
      %vm708 = vcmask 27648
      %709 = vst.msk [vmem:[#allocation2] sm:$0xf] %vm708, %v696
      %710 = vst.msk [vmem:[#allocation2 + $0x4] sm:$0xf] %vm708, %v697
      %711 = vst.msk [vmem:[#allocation2 + $0x8] sm:$0xf] %vm708, %v698
      %712 = vst.msk [vmem:[#allocation2 + $0xc] sm:$0xf] %vm708, %v699
      %713 = vst.msk [vmem:[#allocation2 + $0x10] sm:$0xf] %vm708, %v700
      %714 = vst.msk [vmem:[#allocation2 + $0x14] sm:$0xf] %vm708, %v701
      %v715 = vld [vmem:[%s527] sm:$0xf]
      %v716 = vld [vmem:[%s4] sm:$0xf]
      %v717 = vld [vmem:[%s4 + $0x4] sm:$0xf]
      %v718 = vld [vmem:[%s5] sm:$0x1]
      %v720 = vlaneseq
      %v721 = vshrl.u32 %v720, 7
      %v722 = vsub.s32 0, %v721
      %v723 = vrot.slane %v718, %v722
      %v727 = vunpack.c.l.b16 %v716
      %v728 = vunpack.c.l.b16 %v717
      %v729 = vpack.c.b16 %v728, %v727
      %v732 = vsel %vm605, %v715, 0
      %734 = vmatprep.subr.bf16.mxu0 0
      %735 = vmatpush1.bf16.msra.mxu0 0
      %736 = vmatprep.subr.bf16.mxu0 0
      %737 = vmatpush1.bf16.msra.mxu0 0
      %738 = vmatprep.subr.bf16.mxu0 0
      %739 = vmatpush1.bf16.msra.mxu0 0
      %740 = vmatprep.subr.bf16.mxu0 0
      %741 = vmatpush1.bf16.msra.mxu0 0
      %742 = vmatprep.subr.bf16.mxu0 0
      %743 = vmatpush1.bf16.msra.mxu0 0
      %744 = vmatprep.subr.bf16.mxu0 0
      %745 = vmatpush1.bf16.msra.mxu0 0
      %746 = vmatprep.subr.bf16.mxu0 0
      %747 = vmatpush1.bf16.msra.mxu0 0
      %748 = vmatprep.subr.bf16.mxu0 0
      %749 = vmatpush1.bf16.msra.mxu0 %v729
      %750 = vmatprep.subr.bf16.mxu0 0
      %751 = vmatpush2.bf16.msra.mxu0 0
      %752 = vmatprep.subr.bf16.mxu0 0
      %753 = vmatpush2.bf16.msra.mxu0 0
      %754 = vmatprep.subr.bf16.mxu0 0
      %755 = vmatpush2.bf16.msra.mxu0 0
      %756 = vmatprep.subr.bf16.mxu0 0
      %757 = vmatpush2.bf16.msra.mxu0 0
      %758 = vmatprep.subr.bf16.mxu0 0
      %759 = vmatpush2.bf16.msra.mxu0 0
      %760 = vmatprep.subr.bf16.mxu0 0
      %761 = vmatpush2.bf16.msra.mxu0 0
      %762 = vmatprep.subr.bf16.mxu0 0
      %763 = vmatpush2.bf16.msra.mxu0 0
      %764 = vmatprep.subr.bf16.mxu0 0
      %765 = vmatpush2.bf16.msra.mxu0 0
      %766 = vmatprep.mubr.bf16.mxu0 0
      %767 = vmatmul.mubr.bf16.gmra.mxu0 %v732
      %v768 = vpop.f32.mrf.mxu0
      %v769 = vadd.f32 %v723, %v768
      %v770 = vpop.f32.mrf.mxu0
      %v771 = vpop.f32.mrf.mxu0
      %v772 = vpop.f32.mrf.mxu0
      %773 = vdwg.mxu0
      %v774 = vmul.f32 %v769, 0.1
      %v775 = vmax.f32 %v769, %v774
      %v776 = vpack.c.bf16 %v775, %v775
      %777 = vst.msk [vmem:[#allocation2 + $0x18] sm:$0xf] %vm708, %v776
      %v778 = vld [vmem:[%s540] sm:$0xf]
      %v779 = vld [vmem:[%s4] sm:$0xf]
      %v780 = vld [vmem:[%s4 + $0x4] sm:$0xf]
      %v781 = vld [vmem:[%s5] sm:$0x1]
      %v783 = vlaneseq
      %v784 = vshrl.u32 %v783, 7
      %v785 = vsub.s32 0, %v784
      %v786 = vrot.slane %v781, %v785
      %v790 = vunpack.c.l.b16 %v779
      %v791 = vunpack.c.l.b16 %v780
      %v792 = vpack.c.b16 %v791, %v790
      %v795 = vsel %vm605, %v778, 0
      %797 = vmatprep.subr.bf16.mxu0 0
      %798 = vmatpush1.bf16.msra.mxu0 0
      %799 = vmatprep.subr.bf16.mxu0 0
      %800 = vmatpush1.bf16.msra.mxu0 0
      %801 = vmatprep.subr.bf16.mxu0 0
      %802 = vmatpush1.bf16.msra.mxu0 0
      %803 = vmatprep.subr.bf16.mxu0 0
      %804 = vmatpush1.bf16.msra.mxu0 0
      %805 = vmatprep.subr.bf16.mxu0 0
      %806 = vmatpush1.bf16.msra.mxu0 0
      %807 = vmatprep.subr.bf16.mxu0 0
      %808 = vmatpush1.bf16.msra.mxu0 0
      %809 = vmatprep.subr.bf16.mxu0 0
      %810 = vmatpush1.bf16.msra.mxu0 0
      %811 = vmatprep.subr.bf16.mxu0 0
      %812 = vmatpush1.bf16.msra.mxu0 %v792
      %813 = vmatprep.subr.bf16.mxu0 0
      %814 = vmatpush2.bf16.msra.mxu0 0
      %815 = vmatprep.subr.bf16.mxu0 0
      %816 = vmatpush2.bf16.msra.mxu0 0
      %817 = vmatprep.subr.bf16.mxu0 0
      %818 = vmatpush2.bf16.msra.mxu0 0
      %819 = vmatprep.subr.bf16.mxu0 0
      %820 = vmatpush2.bf16.msra.mxu0 0
      %821 = vmatprep.subr.bf16.mxu0 0
      %822 = vmatpush2.bf16.msra.mxu0 0
      %823 = vmatprep.subr.bf16.mxu0 0
      %824 = vmatpush2.bf16.msra.mxu0 0
      %825 = vmatprep.subr.bf16.mxu0 0
      %826 = vmatpush2.bf16.msra.mxu0 0
      %827 = vmatprep.subr.bf16.mxu0 0
      %828 = vmatpush2.bf16.msra.mxu0 0
      %829 = vmatprep.mubr.bf16.mxu0 0
      %830 = vmatmul.mubr.bf16.gmra.mxu0 %v795
      %v831 = vpop.f32.mrf.mxu0
      %v832 = vadd.f32 %v786, %v831
      %v833 = vpop.f32.mrf.mxu0
      %v834 = vpop.f32.mrf.mxu0
      %v835 = vpop.f32.mrf.mxu0
      %836 = vdwg.mxu0
      %v837 = vmul.f32 %v832, 0.1
      %v838 = vmax.f32 %v832, %v837
      %v839 = vpack.c.bf16 %v838, %v838
      %840 = vst.msk [vmem:[#allocation2 + $0x1c] sm:$0xf] %vm708, %v839
      %v841 = vld [vmem:[%s554] sm:$0xf]
      %v842 = vld [vmem:[%s4] sm:$0xf]
      %v843 = vld [vmem:[%s4 + $0x4] sm:$0xf]
      %v844 = vld [vmem:[%s5] sm:$0x1]
      %v846 = vlaneseq
      %v847 = vshrl.u32 %v846, 7
      %v848 = vsub.s32 0, %v847
      %v849 = vrot.slane %v844, %v848
      %v853 = vunpack.c.l.b16 %v842
      %v854 = vunpack.c.l.b16 %v843
      %v855 = vpack.c.b16 %v854, %v853
      %v858 = vsel %vm605, %v841, 0
      %860 = vmatprep.subr.bf16.mxu0 0
      %861 = vmatpush1.bf16.msra.mxu0 0
      %862 = vmatprep.subr.bf16.mxu0 0
      %863 = vmatpush1.bf16.msra.mxu0 0
      %864 = vmatprep.subr.bf16.mxu0 0
      %865 = vmatpush1.bf16.msra.mxu0 0
      %866 = vmatprep.subr.bf16.mxu0 0
      %867 = vmatpush1.bf16.msra.mxu0 0
      %868 = vmatprep.subr.bf16.mxu0 0
      %869 = vmatpush1.bf16.msra.mxu0 0
      %870 = vmatprep.subr.bf16.mxu0 0
      %871 = vmatpush1.bf16.msra.mxu0 0
      %872 = vmatprep.subr.bf16.mxu0 0
      %873 = vmatpush1.bf16.msra.mxu0 0
      %874 = vmatprep.subr.bf16.mxu0 0
      %875 = vmatpush1.bf16.msra.mxu0 %v855
      %876 = vmatprep.subr.bf16.mxu0 0
      %877 = vmatpush2.bf16.msra.mxu0 0
      %878 = vmatprep.subr.bf16.mxu0 0
      %879 = vmatpush2.bf16.msra.mxu0 0
      %880 = vmatprep.subr.bf16.mxu0 0
      %881 = vmatpush2.bf16.msra.mxu0 0
      %882 = vmatprep.subr.bf16.mxu0 0
      %883 = vmatpush2.bf16.msra.mxu0 0
      %884 = vmatprep.subr.bf16.mxu0 0
      %885 = vmatpush2.bf16.msra.mxu0 0
      %886 = vmatprep.subr.bf16.mxu0 0
      %887 = vmatpush2.bf16.msra.mxu0 0
      %888 = vmatprep.subr.bf16.mxu0 0
      %889 = vmatpush2.bf16.msra.mxu0 0
      %890 = vmatprep.subr.bf16.mxu0 0
      %891 = vmatpush2.bf16.msra.mxu0 0
      %892 = vmatprep.mubr.bf16.mxu0 0
      %893 = vmatmul.mubr.bf16.gmra.mxu0 %v858
      %v894 = vpop.f32.mrf.mxu0
      %v895 = vadd.f32 %v849, %v894
      %v896 = vpop.f32.mrf.mxu0
      %v897 = vpop.f32.mrf.mxu0
      %v898 = vpop.f32.mrf.mxu0
      %899 = vdwg.mxu0
      %v900 = vmul.f32 %v895, 0.1
      %v901 = vmax.f32 %v895, %v900
      %v902 = vpack.c.bf16 %v901, %v901
      %903 = vst.msk [vmem:[#allocation2 + $0x20] sm:$0xf] %vm708, %v902
      %v904 = vld [vmem:[#allocation2] sm:$0xf]
      %v905 = vld [vmem:[#allocation2 + $0x4] sm:$0xf]
      %v906 = vld [vmem:[#allocation2 + $0x8] sm:$0xf]
      %v907 = vld [vmem:[#allocation2 + $0xc] sm:$0xf]
      %v908 = vld [vmem:[#allocation2 + $0x10] sm:$0xf]
      %v909 = vld [vmem:[#allocation2 + $0x14] sm:$0xf]
      %910 = vst.msk [vmem:[#allocation3] sm:$0xf] %vm708, %v904
      %911 = vst.msk [vmem:[#allocation3 + $0x4] sm:$0xf] %vm708, %v905
      %912 = vst.msk [vmem:[#allocation3 + $0x8] sm:$0xf] %vm708, %v906
      %913 = vst.msk [vmem:[#allocation3 + $0xc] sm:$0xf] %vm708, %v907
      %914 = vst.msk [vmem:[#allocation3 + $0x10] sm:$0xf] %vm708, %v908
      %915 = vst.msk [vmem:[#allocation3 + $0x14] sm:$0xf] %vm708, %v909
      %v916 = vld [vmem:[#allocation2] sm:$0xf]
      %v917 = vld [vmem:[#allocation2 + $0x4] sm:$0xf]
      %v918 = vld [vmem:[#allocation2 + $0x8] sm:$0xf]
      %v919 = vld [vmem:[#allocation2 + $0xc] sm:$0xf]
      %v920 = vld [vmem:[#allocation2 + $0x10] sm:$0xf]
      %v921 = vld [vmem:[#allocation2 + $0x14] sm:$0xf]
      %v922 = vld [vmem:[#allocation2 + $0x18] sm:$0x1]
      %vm923 = vsmask.f32 3328
      %vm924 = vsmask.f32 7440
      %vm925 = vmor %vm923, %vm924
      %v927 = vshrl.u32 %v916, 16
      %v929 = vrot.slane %v927, 4
      %v930 = vshll.u32 %v916, 16
      %v932 = vrot.slane %v930, 5
      %v933 = vor.u32 %v929, %v932
      %v934 = vrot.slane %v933, 4
      %v936 = vshll.u32 %v917, 16
      %v938 = vrot.slane %v936, 5
      %v939 = vsel %vm925, %v934, %v938
      %v940 = vshrl.u32 %v917, 16
      %v942 = vrot.slane %v940, 4
      %v943 = vor.u32 %v942, %v938
      %v944 = vrot.slane %v943, 4
      %v946 = vshll.u32 %v918, 16
      %v948 = vrot.slane %v946, 5
      %v949 = vsel %vm925, %v944, %v948
      %v950 = vshrl.u32 %v918, 16
      %v952 = vrot.slane %v950, 4
      %v953 = vor.u32 %v952, %v948
      %v954 = vrot.slane %v953, 4
      %v956 = vshll.u32 %v919, 16
      %v958 = vrot.slane %v956, 5
      %v959 = vsel %vm925, %v954, %v958
      %v960 = vshrl.u32 %v919, 16
      %v962 = vrot.slane %v960, 4
      %v963 = vor.u32 %v962, %v958
      %v964 = vrot.slane %v963, 4
      %v966 = vshll.u32 %v920, 16
      %v968 = vrot.slane %v966, 5
      %v969 = vsel %vm925, %v964, %v968
      %v970 = vshrl.u32 %v920, 16
      %v972 = vrot.slane %v970, 4
      %v973 = vor.u32 %v972, %v968
      %v974 = vrot.slane %v973, 4
      %v976 = vshll.u32 %v921, 16
      %v978 = vrot.slane %v976, 5
      %v979 = vsel %vm925, %v974, %v978
      %v980 = vshrl.u32 %v921, 16
      %v982 = vrot.slane %v980, 4
      %v983 = vor.u32 %v982, %v978
      %v984 = vrot.slane %v983, 4
      %v986 = vshll.u32 %v922, 16
      %v988 = vrot.slane %v986, 5
      %v989 = vsel %vm925, %v984, %v988
      %990 = vrot.lane.b32.xlu0 %v939, 4
      %v991 = vpop.permute.xlu0 %990
      %992 = vrot.lane.b32.xlu0 %v949, 4
      %v993 = vpop.permute.xlu0 %992
      %994 = vrot.lane.b32.xlu0 %v959, 4
      %v995 = vpop.permute.xlu0 %994
      %996 = vrot.lane.b32.xlu0 %v969, 4
      %v997 = vpop.permute.xlu0 %996
      %998 = vrot.lane.b32.xlu0 %v979, 4
      %v999 = vpop.permute.xlu0 %998
      %1000 = vrot.lane.b32.xlu0 %v989, 4
      %v1001 = vpop.permute.xlu0 %1000
      %vm1008 = vcmask 60448
      %1009 = vst.msk [vmem:[#allocation3] sm:$0xf] %vm1008, %v991
      %1010 = vst.msk [vmem:[#allocation3 + $0x4] sm:$0xf] %vm1008, %v993
      %1011 = vst.msk [vmem:[#allocation3 + $0x8] sm:$0xf] %vm1008, %v995
      %1012 = vst.msk [vmem:[#allocation3 + $0xc] sm:$0xf] %vm1008, %v997
      %1013 = vst.msk [vmem:[#allocation3 + $0x10] sm:$0xf] %vm1008, %v999
      %1014 = vst.msk [vmem:[#allocation3 + $0x14] sm:$0xf] %vm1008, %v1001
      %v1015 = vld [vmem:[#allocation2] sm:$0xe]
      %v1016 = vld [vmem:[#allocation2 + $0x4] sm:$0xf]
      %v1017 = vld [vmem:[#allocation2 + $0x8] sm:$0xf]
      %v1018 = vld [vmem:[#allocation2 + $0xc] sm:$0xf]
      %v1019 = vld [vmem:[#allocation2 + $0x10] sm:$0xf]
      %v1020 = vld [vmem:[#allocation2 + $0x14] sm:$0xf]
      %v1021 = vld [vmem:[#allocation2 + $0x18] sm:$0x1]
      %vm1029 = vcmask 1042432
      %vm1030 = vcmask 1046532
      %vm1031 = vmor %vm1029, %vm1030
      %v1032 = vrot.slane %v1015, 5
      %v1033 = vrot.slane %v1032, 4
      %v1034 = vrot.slane %v1016, 5
      %v1035 = vsel %vm1031, %v1033, %v1034
      %v1036 = vrot.slane %v1034, 4
      %v1037 = vrot.slane %v1017, 5
      %v1038 = vsel %vm1031, %v1036, %v1037
      %v1039 = vrot.slane %v1037, 4
      %v1040 = vrot.slane %v1018, 5
      %v1041 = vsel %vm1031, %v1039, %v1040
      %v1042 = vrot.slane %v1040, 4
      %v1043 = vrot.slane %v1019, 5
      %v1044 = vsel %vm1031, %v1042, %v1043
      %v1045 = vrot.slane %v1043, 4
      %v1046 = vrot.slane %v1020, 5
      %v1047 = vsel %vm1031, %v1045, %v1046
      %v1048 = vrot.slane %v1046, 4
      %v1049 = vrot.slane %v1021, 5
      %v1050 = vsel %vm1031, %v1048, %v1049
      %1051 = vrot.lane.b32.xlu0 %v1035, 8
      %v1052 = vpop.permute.xlu0 %1051
      %1053 = vrot.lane.b32.xlu0 %v1038, 8
      %v1054 = vpop.permute.xlu0 %1053
      %1055 = vrot.lane.b32.xlu0 %v1041, 8
      %v1056 = vpop.permute.xlu0 %1055
      %1057 = vrot.lane.b32.xlu0 %v1044, 8
      %v1058 = vpop.permute.xlu0 %1057
      %1059 = vrot.lane.b32.xlu0 %v1047, 8
      %v1060 = vpop.permute.xlu0 %1059
      %1061 = vrot.lane.b32.xlu0 %v1050, 8
      %v1062 = vpop.permute.xlu0 %1061
      %vm1069 = vcmask 93248
      %1070 = vst.msk [vmem:[#allocation3] sm:$0xf] %vm1069, %v1052
      %1071 = vst.msk [vmem:[#allocation3 + $0x4] sm:$0xf] %vm1069, %v1054
      %1072 = vst.msk [vmem:[#allocation3 + $0x8] sm:$0xf] %vm1069, %v1056
      %1073 = vst.msk [vmem:[#allocation3 + $0xc] sm:$0xf] %vm1069, %v1058
      %1074 = vst.msk [vmem:[#allocation3 + $0x10] sm:$0xf] %vm1069, %v1060
      %1075 = vst.msk [vmem:[#allocation3 + $0x14] sm:$0xf] %vm1069, %v1062
      %v1076 = vld [vmem:[#allocation2 + $0x4] sm:$0xf]
      %v1077 = vld [vmem:[#allocation2 + $0x8] sm:$0xf]
      %v1078 = vld [vmem:[#allocation2 + $0xc] sm:$0xf]
      %v1079 = vld [vmem:[#allocation2 + $0x10] sm:$0xf]
      %v1080 = vld [vmem:[#allocation2 + $0x14] sm:$0xf]
      %v1081 = vld [vmem:[#allocation2 + $0x18] sm:$0xf]
      %1088 = vrot.lane.b32.xlu0 %v1076, 12
      %v1089 = vpop.permute.xlu0 %1088
      %1090 = vrot.lane.b32.xlu0 %v1077, 12
      %v1091 = vpop.permute.xlu0 %1090
      %1092 = vrot.lane.b32.xlu0 %v1078, 12
      %v1093 = vpop.permute.xlu0 %1092
      %1094 = vrot.lane.b32.xlu0 %v1079, 12
      %v1095 = vpop.permute.xlu0 %1094
      %1096 = vrot.lane.b32.xlu0 %v1080, 12
      %v1097 = vpop.permute.xlu0 %1096
      %1098 = vrot.lane.b32.xlu0 %v1081, 12
      %v1099 = vpop.permute.xlu0 %1098
      %vm1106 = vcmask 126048
      %1107 = vst.msk [vmem:[#allocation3] sm:$0xf] %vm1106, %v1089
      %1108 = vst.msk [vmem:[#allocation3 + $0x4] sm:$0xf] %vm1106, %v1091
      %1109 = vst.msk [vmem:[#allocation3 + $0x8] sm:$0xf] %vm1106, %v1093
      %1110 = vst.msk [vmem:[#allocation3 + $0xc] sm:$0xf] %vm1106, %v1095
      %1111 = vst.msk [vmem:[#allocation3 + $0x10] sm:$0xf] %vm1106, %v1097
      %1112 = vst.msk [vmem:[#allocation3 + $0x14] sm:$0xf] %vm1106, %v1099
      %v1113 = vld [vmem:[#allocation2 + $0x4] sm:$0xf]
      %v1114 = vld [vmem:[#allocation2 + $0x8] sm:$0xf]
      %v1115 = vld [vmem:[#allocation2 + $0xc] sm:$0xf]
      %v1116 = vld [vmem:[#allocation2 + $0x10] sm:$0xf]
      %v1117 = vld [vmem:[#allocation2 + $0x14] sm:$0xf]
      %v1118 = vld [vmem:[#allocation2 + $0x18] sm:$0xf]
      %v1119 = vld [vmem:[#allocation2 + $0x1c] sm:$0x1]
      %v1121 = vshrl.u32 %v1113, 16
      %v1123 = vrot.slane %v1121, 4
      %v1124 = vshll.u32 %v1113, 16
      %v1126 = vrot.slane %v1124, 5
      %v1127 = vor.u32 %v1123, %v1126
      %v1128 = vrot.slane %v1127, 4
      %v1130 = vshll.u32 %v1114, 16
      %v1132 = vrot.slane %v1130, 5
      %v1133 = vsel %vm925, %v1128, %v1132
      %v1134 = vshrl.u32 %v1114, 16
      %v1136 = vrot.slane %v1134, 4
      %v1137 = vor.u32 %v1136, %v1132
      %v1138 = vrot.slane %v1137, 4
      %v1140 = vshll.u32 %v1115, 16
      %v1142 = vrot.slane %v1140, 5
      %v1143 = vsel %vm925, %v1138, %v1142
      %v1144 = vshrl.u32 %v1115, 16
      %v1146 = vrot.slane %v1144, 4
      %v1147 = vor.u32 %v1146, %v1142
      %v1148 = vrot.slane %v1147, 4
      %v1150 = vshll.u32 %v1116, 16
      %v1152 = vrot.slane %v1150, 5
      %v1153 = vsel %vm925, %v1148, %v1152
      %v1154 = vshrl.u32 %v1116, 16
      %v1156 = vrot.slane %v1154, 4
      %v1157 = vor.u32 %v1156, %v1152
      %v1158 = vrot.slane %v1157, 4
      %v1160 = vshll.u32 %v1117, 16
      %v1162 = vrot.slane %v1160, 5
      %v1163 = vsel %vm925, %v1158, %v1162
      %v1164 = vshrl.u32 %v1117, 16
      %v1166 = vrot.slane %v1164, 4
      %v1167 = vor.u32 %v1166, %v1162
      %v1168 = vrot.slane %v1167, 4
      %v1170 = vshll.u32 %v1118, 16
      %v1172 = vrot.slane %v1170, 5
      %v1173 = vsel %vm925, %v1168, %v1172
      %v1174 = vshrl.u32 %v1118, 16
      %v1176 = vrot.slane %v1174, 4
      %v1177 = vor.u32 %v1176, %v1172
      %v1178 = vrot.slane %v1177, 4
      %v1180 = vshll.u32 %v1119, 16
      %v1182 = vrot.slane %v1180, 5
      %v1183 = vsel %vm925, %v1178, %v1182
      %1184 = vrot.lane.b32.xlu0 %v1133, 16
      %v1185 = vpop.permute.xlu0 %1184
      %1186 = vrot.lane.b32.xlu0 %v1143, 16
      %v1187 = vpop.permute.xlu0 %1186
      %1188 = vrot.lane.b32.xlu0 %v1153, 16
      %v1189 = vpop.permute.xlu0 %1188
      %1190 = vrot.lane.b32.xlu0 %v1163, 16
      %v1191 = vpop.permute.xlu0 %1190
      %1192 = vrot.lane.b32.xlu0 %v1173, 16
      %v1193 = vpop.permute.xlu0 %1192
      %1194 = vrot.lane.b32.xlu0 %v1183, 16
      %v1195 = vpop.permute.xlu0 %1194
      %vm1202 = vcmask 158848
      %1203 = vst.msk [vmem:[#allocation3] sm:$0xf] %vm1202, %v1185
      %1204 = vst.msk [vmem:[#allocation3 + $0x4] sm:$0xf] %vm1202, %v1187
      %1205 = vst.msk [vmem:[#allocation3 + $0x8] sm:$0xf] %vm1202, %v1189
      %1206 = vst.msk [vmem:[#allocation3 + $0xc] sm:$0xf] %vm1202, %v1191
      %1207 = vst.msk [vmem:[#allocation3 + $0x10] sm:$0xf] %vm1202, %v1193
      %1208 = vst.msk [vmem:[#allocation3 + $0x14] sm:$0xf] %vm1202, %v1195
      %v1209 = vld [vmem:[#allocation2 + $0x4] sm:$0xe]
      %v1210 = vld [vmem:[#allocation2 + $0x8] sm:$0xf]
      %v1211 = vld [vmem:[#allocation2 + $0xc] sm:$0xf]
      %v1212 = vld [vmem:[#allocation2 + $0x10] sm:$0xf]
      %v1213 = vld [vmem:[#allocation2 + $0x14] sm:$0xf]
      %v1214 = vld [vmem:[#allocation2 + $0x18] sm:$0xf]
      %v1215 = vld [vmem:[#allocation2 + $0x1c] sm:$0x1]
      %v1223 = vrot.slane %v1209, 5
      %v1224 = vrot.slane %v1223, 4
      %v1225 = vrot.slane %v1210, 5
      %v1226 = vsel %vm1031, %v1224, %v1225
      %v1227 = vrot.slane %v1225, 4
      %v1228 = vrot.slane %v1211, 5
      %v1229 = vsel %vm1031, %v1227, %v1228
      %v1230 = vrot.slane %v1228, 4
      %v1231 = vrot.slane %v1212, 5
      %v1232 = vsel %vm1031, %v1230, %v1231
      %v1233 = vrot.slane %v1231, 4
      %v1234 = vrot.slane %v1213, 5
      %v1235 = vsel %vm1031, %v1233, %v1234
      %v1236 = vrot.slane %v1234, 4
      %v1237 = vrot.slane %v1214, 5
      %v1238 = vsel %vm1031, %v1236, %v1237
      %v1239 = vrot.slane %v1237, 4
      %v1240 = vrot.slane %v1215, 5
      %v1241 = vsel %vm1031, %v1239, %v1240
      %1242 = vrot.lane.b32.xlu0 %v1226, 20
      %v1243 = vpop.permute.xlu0 %1242
      %1244 = vrot.lane.b32.xlu0 %v1229, 20
      %v1245 = vpop.permute.xlu0 %1244
      %1246 = vrot.lane.b32.xlu0 %v1232, 20
      %v1247 = vpop.permute.xlu0 %1246
      %1248 = vrot.lane.b32.xlu0 %v1235, 20
      %v1249 = vpop.permute.xlu0 %1248
      %1250 = vrot.lane.b32.xlu0 %v1238, 20
      %v1251 = vpop.permute.xlu0 %1250
      %1252 = vrot.lane.b32.xlu0 %v1241, 20
      %v1253 = vpop.permute.xlu0 %1252
      %vm1260 = vcmask 191648
      %1261 = vst.msk [vmem:[#allocation3] sm:$0xf] %vm1260, %v1243
      %1262 = vst.msk [vmem:[#allocation3 + $0x4] sm:$0xf] %vm1260, %v1245
      %1263 = vst.msk [vmem:[#allocation3 + $0x8] sm:$0xf] %vm1260, %v1247
      %1264 = vst.msk [vmem:[#allocation3 + $0xc] sm:$0xf] %vm1260, %v1249
      %1265 = vst.msk [vmem:[#allocation3 + $0x10] sm:$0xf] %vm1260, %v1251
      %1266 = vst.msk [vmem:[#allocation3 + $0x14] sm:$0xf] %vm1260, %v1253
      %v1267 = vld [vmem:[#allocation2 + $0x8] sm:$0xf]
      %v1268 = vld [vmem:[#allocation2 + $0xc] sm:$0xf]
      %v1269 = vld [vmem:[#allocation2 + $0x10] sm:$0xf]
      %v1270 = vld [vmem:[#allocation2 + $0x14] sm:$0xf]
      %v1271 = vld [vmem:[#allocation2 + $0x18] sm:$0xf]
      %v1272 = vld [vmem:[#allocation2 + $0x1c] sm:$0xf]
      %1279 = vrot.lane.b32.xlu0 %v1267, 24
      %v1280 = vpop.permute.xlu0 %1279
      %1281 = vrot.lane.b32.xlu0 %v1268, 24
      %v1282 = vpop.permute.xlu0 %1281
      %1283 = vrot.lane.b32.xlu0 %v1269, 24
      %v1284 = vpop.permute.xlu0 %1283
      %1285 = vrot.lane.b32.xlu0 %v1270, 24
      %v1286 = vpop.permute.xlu0 %1285
      %1287 = vrot.lane.b32.xlu0 %v1271, 24
      %v1288 = vpop.permute.xlu0 %1287
      %1289 = vrot.lane.b32.xlu0 %v1272, 24
      %v1290 = vpop.permute.xlu0 %1289
      %vm1297 = vcmask 224448
      %1298 = vst.msk [vmem:[#allocation3] sm:$0xf] %vm1297, %v1280
      %1299 = vst.msk [vmem:[#allocation3 + $0x4] sm:$0xf] %vm1297, %v1282
      %1300 = vst.msk [vmem:[#allocation3 + $0x8] sm:$0xf] %vm1297, %v1284
      %1301 = vst.msk [vmem:[#allocation3 + $0xc] sm:$0xf] %vm1297, %v1286
      %1302 = vst.msk [vmem:[#allocation3 + $0x10] sm:$0xf] %vm1297, %v1288
      %1303 = vst.msk [vmem:[#allocation3 + $0x14] sm:$0xf] %vm1297, %v1290
      %v1304 = vld [vmem:[#allocation2 + $0x8] sm:$0xf]
      %v1305 = vld [vmem:[#allocation2 + $0xc] sm:$0xf]
      %v1306 = vld [vmem:[#allocation2 + $0x10] sm:$0xf]
      %v1307 = vld [vmem:[#allocation2 + $0x14] sm:$0xf]
      %v1308 = vld [vmem:[#allocation2 + $0x18] sm:$0xf]
      %v1309 = vld [vmem:[#allocation2 + $0x1c] sm:$0xf]
      %v1310 = vld [vmem:[#allocation2 + $0x20] sm:$0x1]
      %v1312 = vshrl.u32 %v1304, 16
      %v1314 = vrot.slane %v1312, 4
      %v1315 = vshll.u32 %v1304, 16
      %v1317 = vrot.slane %v1315, 5
      %v1318 = vor.u32 %v1314, %v1317
      %v1319 = vrot.slane %v1318, 4
      %v1321 = vshll.u32 %v1305, 16
      %v1323 = vrot.slane %v1321, 5
      %v1324 = vsel %vm925, %v1319, %v1323
      %v1325 = vshrl.u32 %v1305, 16
      %v1327 = vrot.slane %v1325, 4
      %v1328 = vor.u32 %v1327, %v1323
      %v1329 = vrot.slane %v1328, 4
      %v1331 = vshll.u32 %v1306, 16
      %v1333 = vrot.slane %v1331, 5
      %v1334 = vsel %vm925, %v1329, %v1333
      %v1335 = vshrl.u32 %v1306, 16
      %v1337 = vrot.slane %v1335, 4
      %v1338 = vor.u32 %v1337, %v1333
      %v1339 = vrot.slane %v1338, 4
      %v1341 = vshll.u32 %v1307, 16
      %v1343 = vrot.slane %v1341, 5
      %v1344 = vsel %vm925, %v1339, %v1343
      %v1345 = vshrl.u32 %v1307, 16
      %v1347 = vrot.slane %v1345, 4
      %v1348 = vor.u32 %v1347, %v1343
      %v1349 = vrot.slane %v1348, 4
      %v1351 = vshll.u32 %v1308, 16
      %v1353 = vrot.slane %v1351, 5
      %v1354 = vsel %vm925, %v1349, %v1353
      %v1355 = vshrl.u32 %v1308, 16
      %v1357 = vrot.slane %v1355, 4
      %v1358 = vor.u32 %v1357, %v1353
      %v1359 = vrot.slane %v1358, 4
      %v1361 = vshll.u32 %v1309, 16
      %v1363 = vrot.slane %v1361, 5
      %v1364 = vsel %vm925, %v1359, %v1363
      %v1365 = vshrl.u32 %v1309, 16
      %v1367 = vrot.slane %v1365, 4
      %v1368 = vor.u32 %v1367, %v1363
      %v1369 = vrot.slane %v1368, 4
      %v1371 = vshll.u32 %v1310, 16
      %v1373 = vrot.slane %v1371, 5
      %v1374 = vsel %vm925, %v1369, %v1373
      %1375 = vrot.lane.b32.xlu0 %v1324, 28
      %v1376 = vpop.permute.xlu0 %1375
      %1377 = vrot.lane.b32.xlu0 %v1334, 28
      %v1378 = vpop.permute.xlu0 %1377
      %1379 = vrot.lane.b32.xlu0 %v1344, 28
      %v1380 = vpop.permute.xlu0 %1379
      %1381 = vrot.lane.b32.xlu0 %v1354, 28
      %v1382 = vpop.permute.xlu0 %1381
      %1383 = vrot.lane.b32.xlu0 %v1364, 28
      %v1384 = vpop.permute.xlu0 %1383
      %1385 = vrot.lane.b32.xlu0 %v1374, 28
      %v1386 = vpop.permute.xlu0 %1385
      %vm1393 = vcmask 257248
      %1394 = vst.msk [vmem:[#allocation3] sm:$0xf] %vm1393, %v1376
      %1395 = vst.msk [vmem:[#allocation3 + $0x4] sm:$0xf] %vm1393, %v1378
      %1396 = vst.msk [vmem:[#allocation3 + $0x8] sm:$0xf] %vm1393, %v1380
      %1397 = vst.msk [vmem:[#allocation3 + $0xc] sm:$0xf] %vm1393, %v1382
      %1398 = vst.msk [vmem:[#allocation3 + $0x10] sm:$0xf] %vm1393, %v1384
      %1399 = vst.msk [vmem:[#allocation3 + $0x14] sm:$0xf] %vm1393, %v1386
      %v1400 = vld [vmem:[#allocation2 + $0x8] sm:$0xe]
      %v1401 = vld [vmem:[#allocation2 + $0xc] sm:$0xf]
      %v1402 = vld [vmem:[#allocation2 + $0x10] sm:$0xf]
      %v1403 = vld [vmem:[#allocation2 + $0x14] sm:$0xf]
      %v1404 = vld [vmem:[#allocation2 + $0x18] sm:$0xf]
      %v1405 = vld [vmem:[#allocation2 + $0x1c] sm:$0xf]
      %v1406 = vld [vmem:[#allocation2 + $0x20] sm:$0x1]
      %v1414 = vrot.slane %v1400, 5
      %v1415 = vrot.slane %v1414, 4
      %v1416 = vrot.slane %v1401, 5
      %v1417 = vsel %vm1031, %v1415, %v1416
      %v1418 = vrot.slane %v1416, 4
      %v1419 = vrot.slane %v1402, 5
      %v1420 = vsel %vm1031, %v1418, %v1419
      %v1421 = vrot.slane %v1419, 4
      %v1422 = vrot.slane %v1403, 5
      %v1423 = vsel %vm1031, %v1421, %v1422
      %v1424 = vrot.slane %v1422, 4
      %v1425 = vrot.slane %v1404, 5
      %v1426 = vsel %vm1031, %v1424, %v1425
      %v1427 = vrot.slane %v1425, 4
      %v1428 = vrot.slane %v1405, 5
      %v1429 = vsel %vm1031, %v1427, %v1428
      %v1430 = vrot.slane %v1428, 4
      %v1431 = vrot.slane %v1406, 5
      %v1432 = vsel %vm1031, %v1430, %v1431
      %1433 = vrot.lane.b32.xlu0 %v1417, 32
      %v1434 = vpop.permute.xlu0 %1433
      %1435 = vrot.lane.b32.xlu0 %v1420, 32
      %v1436 = vpop.permute.xlu0 %1435
      %1437 = vrot.lane.b32.xlu0 %v1423, 32
      %v1438 = vpop.permute.xlu0 %1437
      %1439 = vrot.lane.b32.xlu0 %v1426, 32
      %v1440 = vpop.permute.xlu0 %1439
      %1441 = vrot.lane.b32.xlu0 %v1429, 32
      %v1442 = vpop.permute.xlu0 %1441
      %1443 = vrot.lane.b32.xlu0 %v1432, 32
      %v1444 = vpop.permute.xlu0 %1443
      %vm1451 = vcmask 290048
      %1452 = vst.msk [vmem:[#allocation3] sm:$0xf] %vm1451, %v1434
      %1453 = vst.msk [vmem:[#allocation3 + $0x4] sm:$0xf] %vm1451, %v1436
      %1454 = vst.msk [vmem:[#allocation3 + $0x8] sm:$0xf] %vm1451, %v1438
      %1455 = vst.msk [vmem:[#allocation3 + $0xc] sm:$0xf] %vm1451, %v1440
      %1456 = vst.msk [vmem:[#allocation3 + $0x10] sm:$0xf] %vm1451, %v1442
      %1457 = vst.msk [vmem:[#allocation3 + $0x14] sm:$0xf] %vm1451, %v1444
      %v1458 = vld [vmem:[#allocation3] sm:$0xf]
      %v1459 = vld [vmem:[#allocation3 + $0x4] sm:$0xf]
      %v1460 = vld [vmem:[#allocation3 + $0x8] sm:$0xf]
      %v1461 = vld [vmem:[#allocation3 + $0xc] sm:$0xf]
      %v1462 = vld [vmem:[#allocation3 + $0x10] sm:$0xf]
      %v1463 = vld [vmem:[#allocation3 + $0x14] sm:$0xf]
      %v1464 = vld [vmem:[%s6] sm:$0xf]
      %v1465 = vld [vmem:[%s6 + $0x4] sm:$0xf]
      %v1466 = vld [vmem:[%s6 + $0x8] sm:$0xf]
      %v1467 = vld [vmem:[%s6 + $0xc] sm:$0xf]
      %v1468 = vld [vmem:[%s6 + $0x10] sm:$0x3]
      %v1469 = vld [vmem:[%s7] sm:$0x1]
      %v1471 = vlaneseq
      %v1472 = vshrl.u32 %v1471, 7
      %v1473 = vsub.s32 0, %v1472
      %v1474 = vrot.slane %v1469, %v1473
      %v1482 = vunpack.c.l.b16 %v1458
      %v1483 = vunpack.c.l.b16 %v1459
      %v1484 = vunpack.c.l.b16 %v1460
      %v1485 = vunpack.c.l.b16 %v1461
      %v1486 = vunpack.c.l.b16 %v1462
      %v1487 = vunpack.c.l.b16 %v1463
      %v1488 = vpack.c.b16 %v1483, %v1482
      %v1489 = vpack.c.b16 %v1485, %v1484
      %v1490 = vpack.c.b16 %v1487, %v1486
      %v1496 = vunpack.c.l.b16 %v1464
      %v1497 = vunpack.c.l.b16 %v1465
      %v1498 = vunpack.c.l.b16 %v1466
      %v1499 = vunpack.c.l.b16 %v1467
      %v1500 = vunpack.c.l.b16 %v1468
      %v1501 = vpack.c.b16 %v1497, %v1496
      %v1502 = vpack.c.b16 %v1499, %v1498
      %v1503 = vpack.c.b16 %v1500, %v1500
      %vm1506 = vcmask 293888
      %v1508 = vsel %vm1506, %v1488, 0
      %v1511 = vsel %vm1506, %v1489, 0
      %v1514 = vsel %vm1506, %v1490, 0
      %vm1516 = vcmask 1041408
      %v1518 = vsel %vm1516, %v1503, 0
      %1520 = vmatprep.subr.bf16.mxu0 0
      %1521 = vmatpush1.bf16.msra.mxu0 0
      %1522 = vmatprep.subr.bf16.mxu0 0
      %1523 = vmatpush1.bf16.msra.mxu0 0
      %1524 = vmatprep.subr.bf16.mxu0 0
      %1525 = vmatpush1.bf16.msra.mxu0 0
      %1526 = vmatprep.subr.bf16.mxu0 0
      %1527 = vmatpush1.bf16.msra.mxu0 0
      %1528 = vmatprep.subr.bf16.mxu0 0
      %1529 = vmatpush1.bf16.msra.mxu0 0
      %1530 = vmatprep.subr.bf16.mxu0 0
      %1531 = vmatpush1.bf16.msra.mxu0 %v1518
      %1532 = vmatprep.subr.bf16.mxu0 0
      %1533 = vmatpush1.bf16.msra.mxu0 %v1502
      %1534 = vmatprep.subr.bf16.mxu0 0
      %1535 = vmatpush1.bf16.msra.mxu0 %v1501
      %1536 = vmatprep.subr.bf16.mxu0 0
      %1537 = vmatpush2.bf16.msra.mxu0 0
      %1538 = vmatprep.subr.bf16.mxu0 0
      %1539 = vmatpush2.bf16.msra.mxu0 0
      %1540 = vmatprep.subr.bf16.mxu0 0
      %1541 = vmatpush2.bf16.msra.mxu0 0
      %1542 = vmatprep.subr.bf16.mxu0 0
      %1543 = vmatpush2.bf16.msra.mxu0 0
      %1544 = vmatprep.subr.bf16.mxu0 0
      %1545 = vmatpush2.bf16.msra.mxu0 0
      %1546 = vmatprep.subr.bf16.mxu0 0
      %1547 = vmatpush2.bf16.msra.mxu0 0
      %1548 = vmatprep.subr.bf16.mxu0 0
      %1549 = vmatpush2.bf16.msra.mxu0 0
      %1550 = vmatprep.subr.bf16.mxu0 0
      %1551 = vmatpush2.bf16.msra.mxu0 0
      %1552 = vmatprep.mubr.bf16.mxu0 0
      %1553 = vmatmul.mubr.bf16.gmra.mxu0 %v1508
      %v1554 = vpop.f32.mrf.mxu0
      %v1555 = vadd.f32 %v1474, %v1554
      %v1556 = vpop.f32.mrf.mxu0
      %v1557 = vpop.f32.mrf.mxu0
      %v1558 = vadd.f32 %v1474, %v1557
      %v1559 = vpop.f32.mrf.mxu0
      %1560 = vmatprep.mubr.bf16.mxu0 0
      %1561 = vmatmul.mubr.bf16.gmra.mxu0 %v1511
      %v1562 = vpop.f32.mrf.mxu0
      %v1563 = vadd.f32 %v1474, %v1562
      %v1564 = vpop.f32.mrf.mxu0
      %v1565 = vpop.f32.mrf.mxu0
      %v1566 = vadd.f32 %v1474, %v1565
      %v1567 = vpop.f32.mrf.mxu0
      %1568 = vmatprep.mubr.bf16.mxu0 0
      %1569 = vmatmul.mubr.bf16.gmra.mxu0 %v1514
      %v1570 = vpop.f32.mrf.mxu0
      %v1571 = vadd.f32 %v1474, %v1570
      %v1572 = vpop.f32.mrf.mxu0
      %v1573 = vpop.f32.mrf.mxu0
      %v1574 = vadd.f32 %v1474, %v1573
      %v1575 = vpop.f32.mrf.mxu0
      %1576 = vdwg.mxu0
      %v1577 = vmul.f32 %v1555, 0.1
      %v1578 = vmul.f32 %v1558, 0.1
      %v1579 = vmul.f32 %v1563, 0.1
      %v1580 = vmul.f32 %v1566, 0.1
      %v1581 = vmul.f32 %v1571, 0.1
      %v1582 = vmul.f32 %v1574, 0.1
      %v1583 = vmax.f32 %v1555, %v1577
      %v1584 = vmax.f32 %v1558, %v1578
      %v1585 = vmax.f32 %v1563, %v1579
      %v1586 = vmax.f32 %v1566, %v1580
      %v1587 = vmax.f32 %v1571, %v1581
      %v1588 = vmax.f32 %v1574, %v1582
      %v1589 = vpack.c.bf16 %v1584, %v1583
      %v1590 = vpack.c.bf16 %v1586, %v1585
      %v1591 = vpack.c.bf16 %v1588, %v1587
      %v1592 = vld [vmem:[%s8] sm:$0x3]
      %v1593 = vld [vmem:[%s9] sm:$0x1]
      %v1595 = vlaneseq
      %v1596 = vshrl.u32 %v1595, 7
      %v1597 = vsub.s32 0, %v1596
      %v1598 = vrot.slane %v1593, %v1597
      %vm1600 = vcmask 31744
      %v1602 = vsel %vm1600, %v1589, 0
      %v1605 = vsel %vm1600, %v1590, 0
      %v1608 = vsel %vm1600, %v1591, 0
      %v1611 = vsel %vm1516, %v1592, 0
      %1613 = vmatprep.subr.bf16.mxu0 0
      %1614 = vmatpush1.bf16.msra.mxu0 0
      %1615 = vmatprep.subr.bf16.mxu0 0
      %1616 = vmatpush1.bf16.msra.mxu0 0
      %1617 = vmatprep.subr.bf16.mxu0 0
      %1618 = vmatpush1.bf16.msra.mxu0 0
      %1619 = vmatprep.subr.bf16.mxu0 0
      %1620 = vmatpush1.bf16.msra.mxu0 0
      %1621 = vmatprep.subr.bf16.mxu0 0
      %1622 = vmatpush1.bf16.msra.mxu0 0
      %1623 = vmatprep.subr.bf16.mxu0 0
      %1624 = vmatpush1.bf16.msra.mxu0 0
      %1625 = vmatprep.subr.bf16.mxu0 0
      %1626 = vmatpush1.bf16.msra.mxu0 0
      %1627 = vmatprep.subr.bf16.mxu0 0
      %1628 = vmatpush1.bf16.msra.mxu0 %v1611
      %1629 = vmatprep.subr.bf16.mxu0 0
      %1630 = vmatpush2.bf16.msra.mxu0 0
      %1631 = vmatprep.subr.bf16.mxu0 0
      %1632 = vmatpush2.bf16.msra.mxu0 0
      %1633 = vmatprep.subr.bf16.mxu0 0
      %1634 = vmatpush2.bf16.msra.mxu0 0
      %1635 = vmatprep.subr.bf16.mxu0 0
      %1636 = vmatpush2.bf16.msra.mxu0 0
      %1637 = vmatprep.subr.bf16.mxu0 0
      %1638 = vmatpush2.bf16.msra.mxu0 0
      %1639 = vmatprep.subr.bf16.mxu0 0
      %1640 = vmatpush2.bf16.msra.mxu0 0
      %1641 = vmatprep.subr.bf16.mxu0 0
      %1642 = vmatpush2.bf16.msra.mxu0 0
      %1643 = vmatprep.subr.bf16.mxu0 0
      %1644 = vmatpush2.bf16.msra.mxu0 0
      %1645 = vmatprep.mubr.bf16.mxu0 0
      %1646 = vmatmul.mubr.bf16.gmra.mxu0 %v1602
      %v1647 = vpop.f32.mrf.mxu0
      %v1648 = vadd.f32 %v1598, %v1647
      %v1649 = vpop.f32.mrf.mxu0
      %v1650 = vpop.f32.mrf.mxu0
      %v1651 = vadd.f32 %v1598, %v1650
      %v1652 = vpop.f32.mrf.mxu0
      %1653 = vmatprep.mubr.bf16.mxu0 0
      %1654 = vmatmul.mubr.bf16.gmra.mxu0 %v1605
      %v1655 = vpop.f32.mrf.mxu0
      %v1656 = vadd.f32 %v1598, %v1655
      %v1657 = vpop.f32.mrf.mxu0
      %v1658 = vpop.f32.mrf.mxu0
      %v1659 = vadd.f32 %v1598, %v1658
      %v1660 = vpop.f32.mrf.mxu0
      %1661 = vmatprep.mubr.bf16.mxu0 0
      %1662 = vmatmul.mubr.bf16.gmra.mxu0 %v1608
      %v1663 = vpop.f32.mrf.mxu0
      %v1664 = vadd.f32 %v1598, %v1663
      %v1665 = vpop.f32.mrf.mxu0
      %v1666 = vpop.f32.mrf.mxu0
      %v1667 = vadd.f32 %v1598, %v1666
      %v1668 = vpop.f32.mrf.mxu0
      %1669 = vdwg.mxu0
      %v1670 = vmul.f32 %v1648, 0.1
      %v1671 = vmul.f32 %v1651, 0.1
      %v1672 = vmul.f32 %v1656, 0.1
      %v1673 = vmul.f32 %v1659, 0.1
      %v1674 = vmul.f32 %v1664, 0.1
      %v1675 = vmul.f32 %v1667, 0.1
      %v1676 = vmax.f32 %v1648, %v1670
      %v1677 = vmax.f32 %v1651, %v1671
      %v1678 = vmax.f32 %v1656, %v1672
      %v1679 = vmax.f32 %v1659, %v1673
      %v1680 = vmax.f32 %v1664, %v1674
      %v1681 = vmax.f32 %v1667, %v1675
      %v1682 = vld [vmem:[%s512 + $0x4] sm:$0xf]
      %v1683 = vld [vmem:[%s512 + $0x8] sm:$0xf]
      %v1684 = vld [vmem:[%s512 + $0xc] sm:$0xf]
      %v1685 = vld [vmem:[%s512 + $0x10] sm:$0xf]
      %v1686 = vld [vmem:[%s512 + $0x14] sm:$0xf]
      %v1687 = vunpack.c.l.bf16 %v1682
      %v1688 = vunpack.c.l.bf16 %v1683
      %v1689 = vunpack.c.l.bf16 %v1684
      %v1690 = vunpack.c.l.bf16 %v1685
      %v1691 = vunpack.c.l.bf16 %v1686
      %vm1697 = vcmask 1046528
      %v1698 = vrot.slane %v1687, 1
      %v1699 = vrot.slane %v1688, 1
      %v1700 = vsel %vm1697, %v1698, %v1699
      %v1701 = vrot.slane %v1689, 1
      %v1702 = vsel %vm1697, %v1699, %v1701
      %v1703 = vrot.slane %v1690, 1
      %v1704 = vsel %vm1697, %v1701, %v1703
      %v1705 = vrot.slane %v1691, 1
      %v1706 = vsel %vm1697, %v1703, %v1705
      %v1712 = vadd.f32 %v1676, %v1700
      %v1713 = vadd.f32 %v1677, %v1702
      %v1714 = vadd.f32 %v1678, %v1704
      %v1715 = vadd.f32 %v1679, %v1706
      %v1716 = vadd.f32 %v1680, %v1705
      %v1717 = vpack.c.bf16 %v1713, %v1712
      %v1718 = vpack.c.bf16 %v1715, %v1714
      %v1719 = vpack.c.bf16 %v1716, %v1716
      %v1723 = vunpack.c.l.b16 %v1717
      %v1724 = vunpack.c.h.b16 %v1717
      %v1725 = vunpack.c.l.b16 %v1718
      %v1726 = vunpack.c.h.b16 %v1718
      %v1727 = vunpack.c.l.b16 %v1719
      %v1728 = vpack.c.b16 %v1723, %v1723
      %v1729 = vpack.c.b16 %v1724, %v1724
      %v1730 = vpack.c.b16 %v1725, %v1725
      %v1731 = vpack.c.b16 %v1726, %v1726
      %v1732 = vpack.c.b16 %v1727, %v1727
      %vm1738 = vcmask 125952
      %1739 = vst.msk [vmem:[%s566] sm:$0xf] %vm1738, %v1728
      %1740 = vst.msk [vmem:[%s566 + $0x4] sm:$0xf] %vm1738, %v1729
      %1741 = vst.msk [vmem:[%s566 + $0x8] sm:$0xf] %vm1738, %v1730
      %1742 = vst.msk [vmem:[%s566 + $0xc] sm:$0xf] %vm1738, %v1731
      %vm1743 = vcmask 125952
      %vm1744 = vmand %vm1743, %vm923
      %v1745 = vld [vmem:[%s566 + $0x10] sm:$0xf]
      %v1746 = vsel %vm1744, %v1732, %v1745
      %1747 = vst [vmem:[%s566 + $0x10] sm:$0xf] %v1746
      %v1748 = vld [vmem:[%s527] sm:$0xf]
      %v1749 = vunpack.c.l.bf16 %v1748
      %v1751 = vrot.slane %v1749, 1
      %v1753 = vadd.f32 %v1680, %v1751
      %v1754 = vadd.f32 %v1681, %v1751
      %v1755 = vpack.c.bf16 %v1754, %v1753
      %v1757 = vunpack.c.l.b16 %v1755
      %v1758 = vunpack.c.h.b16 %v1755
      %v1759 = vpack.c.b16 %v1757, %v1757
      %v1760 = vpack.c.b16 %v1758, %v1758
      %vm1763 = vcmask 125955
      %vm1764 = vsmask.f32 7950
      %vm1765 = vmand %vm1763, %vm1764
      %v1766 = vld [vmem:[%s566 + $0x10] sm:$0x8]
      %v1767 = vsel %vm1765, %v1759, %v1766
      %1768 = vst [vmem:[%s566 + $0x10] sm:$0x8] %v1767
      %v1769 = vld [vmem:[%s566 + $0x14] sm:$0xf]
      %v1770 = vsel %vm1744, %v1760, %v1769
      %1771 = vst [vmem:[%s566 + $0x14] sm:$0xf] %v1770
      %v1772 = vld [vmem:[%s540] sm:$0x1]
      %v1773 = vunpack.c.l.bf16 %v1772
      %v1775 = vrot.slane %v1773, 1
      %v1777 = vadd.f32 %v1681, %v1775
      %v1778 = vpack.c.bf16 %v1777, %v1777
      %v1779 = vld [vmem:[%s566 + $0x14] sm:$0x8]
      %v1780 = vsel %vm1765, %v1778, %v1779
      %1781 = vst [vmem:[%s566 + $0x14] sm:$0x8] %v1780
      %s1782 = smul.u32 6, %s26
      %p1783 = scmp.lt.s32.totalorder %s25, 1
      %s1784 = scalar_select %p1783, %s25, 1
      %p1785 = scmp.lt.s32.totalorder %s1782, 5
      %s1786 = scalar_select %p1785, %s1782, 5
      %s1787 = smul.addr %s1784, 6
      %s1788 = sadd.s32 %s1786, %s1787
      %s1789 = smul.addr %s1788, 4
      %s1790 = scalar_lea.vmem %s10, %s1789
      // Predicated region
      $region61: #{unet_branch_forward.1} parent=59 // pred_check
        %p1791 = pneg %p307
      $region62: #{unet_branch_forward.1} parent=59 // pred_check_branch
        %1793 = sbr.rel (%p1791) target = $region64
      $region63: #{unet_branch_forward.1} parent=59 // pred_region
        %s1794 = smul.u32 6, %s26
      $region64: #{unet_branch_forward.1} parent=59 // pred_fallthru
        _
    $region60: #{unet_branch_forward.1} parent=5 // pred_fallthru
      _
    %p1795 = scmp.le.s32.totalorder 2, %s16
    // Predicated region
    $region65: #{unet_branch_forward.1} parent=5 // pred_check
      %p1796 = pneg %p1795
    $region66: #{unet_branch_forward.1} parent=5 // pred_check_branch
      %1798 = sbr.rel (%p1796) target = $region68
    $region67: #{unet_branch_forward.1} parent=5 // pred_region
      %s1799 = ssub.s32 %s16, 2
      // Predicated region
      $region69: #{unet_branch_forward.1} parent=67 // pred_check
        %p1800 = pneg %p313
      $region70: #{unet_branch_forward.1} parent=67 // pred_check_branch
        %1802 = sbr.rel (%p1800) target = $region72
      $region71: #{unet_branch_forward.1} parent=67 // pred_region
        %s1803 = smul.u32 6, %s28
        %p1804 = scmp.lt.s32.totalorder %s27, 1
        %s1805 = scalar_select %p1804, %s27, 1
        %p1806 = scmp.lt.s32.totalorder %s1803, 5
        %s1807 = scalar_select %p1806, %s1803, 5
        %s1808 = smul.addr %s1805, 6
        %s1809 = sadd.s32 %s1807, %s1808
        %s1810 = smul.addr %s1809, 4
        %s1811 = scalar_lea.vmem %s10, %s1810
      $region72: #{unet_branch_forward.1} parent=67 // pred_fallthru
        _
    $region68: #{unet_branch_forward.1} parent=5 // pred_fallthru
      _
  $region6: #{unet_branch_forward.1} parent=0 // loop_footer
    %s20 = sadd.s32 1, %s16
  $region7: #{unet_branch_forward.1} parent=0 // loop_footer_branch
    %15 = sbr.rel target = $region3
  $region8: #{unet_branch_forward.1} parent=0 // loop_exit
    _

</llo_original>
